<compile_context>
chip_gen: v6e
topology: v6e:2x2x1
jax: 0.10.0
libtpu: 0.0.40
codegen_flags: <defaults>
</compile_context>

<pallas_src>
import functools

import jax
import jax.numpy as jnp
from jax.experimental import pallas as pl
from jax.experimental.pallas import tpu as pltpu


# ----------------------------------------------------------------------------
# Fused Pallas kernel: patch-embed matmul + pos-emb bias + LayerNorm + project
# ----------------------------------------------------------------------------
def fused_embed_kernel(p_ref, wpe_ref, bias_ref, wpr_ref, bpr_ref, o_ref, *,
                       eps):
    # (tile_m, CPP)bf16 @ (CPP, D)bf16 -> f32 accumulate on the MXU.
    tok = jnp.dot(p_ref[...], wpe_ref[...], preferred_element_type=jnp.float32)
    # bias_ref = pre-tiled (pos_emb[1:] broadcast over frames) + b_pe, bf16.
    tok = tok + bias_ref[...].astype(jnp.float32)

    # Final-backbone LayerNorm; statistics kept in f32 (v5e has no bf16 VPU).
    # The affine (gamma, beta) is folded into wpr/bpr on the host.
    mu = jnp.mean(tok, axis=-1, keepdims=True)
    var = jnp.mean(jnp.square(tok - mu), axis=-1, keepdims=True)
    xn = (tok - mu) * jax.lax.rsqrt(var + eps)

    # Projection head (Linear 768->512 analog); gamma folded into wpr_ref,
    # (beta @ W_proj + b_proj) folded into bpr_ref.
    acc = jnp.dot(xn.astype(wpr_ref.dtype), wpr_ref[...],
                  preferred_element_type=jnp.float32)
    o_ref[...] = (acc + bpr_ref[...]).astype(o_ref.dtype)


# ----------------------------------------------------------------------------
# pallas_call wrapper
# ----------------------------------------------------------------------------
def fused_vit_embed(patches, w_pe, bias_tok, w_proj, b_proj, *, tile_m,
                    eps=1e-6, out_dtype=jnp.float32):
    M, CPP = patches.shape
    D = w_pe.shape[1]
    Dp = w_proj.shape[1]
    grid = (pl.cdiv(M, tile_m),)
    kern = functools.partial(fused_embed_kernel, eps=eps)
    out_itemsize = jnp.dtype(out_dtype).itemsize

    # Advisory cost estimate so XLA schedules surrounding glue around the call.
    cost = pl.CostEstimate(
        flops=2 * M * CPP * D + 2 * M * D * Dp,
        transcendentals=0,
        bytes_accessed=(patches.size * patches.dtype.itemsize
                        + w_pe.size * w_pe.dtype.itemsize
                        + bias_tok.size * bias_tok.dtype.itemsize
                        + w_proj.size * w_proj.dtype.itemsize
                        + b_proj.size * b_proj.dtype.itemsize
                        + M * Dp * out_itemsize))

    def build(single_buffer):
        # Constant-index operands (weights / bias): single-buffer them when the
        # Pallas version supports pipeline_mode, reclaiming VMEM for big tiles
        # (matters most for v7x's 64 MiB physical / 32 MiB scoped default).
        const_mode = {"pipeline_mode": pl.Buffered(1)} if single_buffer else {}
        cbuf = 1 if single_buffer else 2
        vmem_est = (2 * tile_m * CPP * patches.dtype.itemsize       # patches x2
                    + 2 * tile_m * Dp * out_itemsize                # out x2
                    + cbuf * (tile_m * D * bias_tok.dtype.itemsize  # bias_tok
                              + CPP * D * w_pe.dtype.itemsize       # W_pe
                              + D * Dp * w_proj.dtype.itemsize      # W_proj
                              + Dp * b_proj.dtype.itemsize))        # b_proj
        vmem_limit = int(min(max(vmem_est * 3 // 2 + (2 << 20), 16 << 20),
                             64 << 20))
        return pl.pallas_call(
            kern,
            out_shape=jax.ShapeDtypeStruct((M, Dp), out_dtype),
            grid_spec=pltpu.PrefetchScalarGridSpec(
                num_scalar_prefetch=0,
                grid=grid,
                in_specs=[
                    pl.BlockSpec((tile_m, CPP), lambda i: (i, 0)),   # patches
                    pl.BlockSpec((CPP, D), lambda i: (0, 0), **const_mode),
                    pl.BlockSpec((tile_m, D), lambda i: (0, 0), **const_mode),
                    pl.BlockSpec((D, Dp), lambda i: (0, 0), **const_mode),
                    pl.BlockSpec((1, Dp), lambda i: (0, 0), **const_mode),
                ],
                out_specs=pl.BlockSpec((tile_m, Dp), lambda i: (i, 0)),
            ),
            compiler_params=pltpu.CompilerParams(
                dimension_semantics=("parallel",),
                vmem_limit_bytes=vmem_limit),
            cost_estimate=cost,
        )

    args = (patches, w_pe, bias_tok, w_proj, b_proj)
    try:
        return build(single_buffer=True)(*args)
    except Exception:
        # pipeline_mode=pl.Buffered(1) unsupported on this jax/backend combo;
        # fall back to default double-buffering of the resident operands.
        return build(single_buffer=False)(*args)


# ----------------------------------------------------------------------------
# Tile selection
# ----------------------------------------------------------------------------
def _pick_frames_per_tile(frames, num_patches, target_rows=1536):
    """Frame-aligned row tile: ~target_rows rows, tile_m % 8 == 0 (prefer 16),
    and an even grid-step count where cheap (v7x: 2 TCs share the 'parallel'
    axis; an odd step count idles one TC for a whole step)."""

    def align_down(f):
        f = max(1, min(f, frames))
        for g in range(f, 0, -1):
            if (g * num_patches) % 8 == 0:
                # Prefer 16-row (bf16 native) alignment if it costs <= 1 frame.
                if ((g * num_patches) % 16 != 0 and g - 1 >= 1
                        and ((g - 1) * num_patches) % 16 == 0):
                    return g - 1
                return g
        return f  # caller falls back to a full-extent tile if unaligned

    fpt = max(1, min(frames, target_rows // max(1, num_patches)))
    fpt = align_down(fpt)
    if fpt < frames:
        steps = -(-frames // fpt)
        if steps % 2 == 1:
            alt = align_down(-(-frames // (steps + 1)))
            if alt * 5 >= fpt * 3:     # don't shrink the tile below ~60%
                fpt = alt
    return fpt


# ----------------------------------------------------------------------------
# ViTEmbedder forward
# ----------------------------------------------------------------------------
def vit_embedder_forward(x, params, *, patch, target_tile_rows=1536,
                         out_dtype=jnp.float32):
    B, T, C, H, W = x.shape
    P = patch
    nh, nw = H // P, W // P
    NP = nh * nw
    Dp = params["w_proj"].shape[1]
    frames = B * T
    M = frames * NP

    # --- glue: patch extraction (Conv2d stride=P equivalent), cast to bf16 ---
    # TODO(synk): fold this im2col into the kernel (in-kernel relayout or DMA
    # gather) to remove its HBM round-trip once Mosaic supports the required
    # lane<->sublane deinterleave; kept host-side for guaranteed compilation.
    xp = x.reshape(frames, C, nh, P, nw, P).transpose(0, 2, 4, 1, 3, 5)
    patches = xp.reshape(M, C * P * P).astype(jnp.bfloat16)

    # --- frame-aligned tile selection ----------------------------------------
    fpt = _pick_frames_per_tile(frames, NP, target_tile_rows)
    tile_m = fpt * NP
    if tile_m % 8 != 0 and tile_m != M:
        fpt, tile_m = frames, M       # full-extent block is always legal

    # --- pre-tiled per-token bias: pos_emb[1:] repeated over frames + b_pe ---
    # (CLS row of pos_emb is never used: the CLS token is dropped in forward().)
    bias_tok = (jnp.tile(params["pos_emb"][0, 1:, :], (fpt, 1))
                + params["b_pe"]).astype(jnp.bfloat16)

    # --- fold LayerNorm affine into the projection ---------------------------
    w_proj_f = params["ln_g"].reshape(-1, 1) * params["w_proj"]     # (D, Dp)
    b_proj_f = params["ln_b"] @ params["w_proj"] + params["b_proj"]  # (1, Dp)

    # --- fused Pallas kernel: patch-embed + pos-emb + LayerNorm + projection -
    out = fused_vit_embed(
        patches,
        params["w_pe"].astype(jnp.bfloat16),
        bias_tok,
        w_proj_f.astype(jnp.bfloat16),
        b_proj_f.astype(jnp.float32),
        tile_m=tile_m,
        out_dtype=out_dtype)

    return out.reshape(B, T, NP, Dp)


# ----------------------------------------------------------------------------
# Pure-JAX f32 reference (same math, unfused) for a tolerance check
# ----------------------------------------------------------------------------
def vit_embedder_reference(x, params, *, patch, eps=1e-6):
    B, T, C, H, W = x.shape
    P = patch
    nh, nw = H // P, W // P
    NP = nh * nw
    frames = B * T
    xp = x.reshape(frames, C, nh, P, nw, P).transpose(0, 2, 4, 1, 3, 5)
    patches = xp.reshape(frames * NP, C * P * P)
    tok = (patches @ params["w_pe"] + params["b_pe"]
           + jnp.tile(params["pos_emb"][0, 1:, :], (frames, 1)))
    mu = tok.mean(-1, keepdims=True)
    var = ((tok - mu) ** 2).mean(-1, keepdims=True)
    xn = (tok - mu) * jax.lax.rsqrt(var + eps)
    xn = xn * params["ln_g"] + params["ln_b"]
    out = xn @ params["w_proj"] + params["b_proj"]
    return out.reshape(B, T, NP, params["w_proj"].shape[1])


def init_params(key, *, C, P, D, Dp, NP):
    ks = jax.random.split(key, 8)
    s_pe = 1.0 / jnp.sqrt(C * P * P)
    s_pr = 1.0 / jnp.sqrt(D)
    return {
        "w_pe": jax.random.normal(ks[0], (C * P * P, D), jnp.float32) * s_pe,
        "b_pe": jax.random.normal(ks[1], (1, D), jnp.float32) * 0.02,
        "pos_emb": jax.random.normal(ks[2], (1, NP + 1, D), jnp.float32) * 0.02,
        "ln_g": jnp.ones((1, D), jnp.float32),
        "ln_b": jnp.zeros((1, D), jnp.float32),
        "w_proj": jax.random.normal(ks[3], (D, Dp), jnp.float32) * s_pr,
        "b_proj": jax.random.normal(ks[4], (1, Dp), jnp.float32) * 0.02,
    }


if __name__ == "__main__":
    # Small shapes structurally consistent with the module
    # (real model: C=3, H=W=224, P=16, NP=196, D=768, Dp=512).
    B, T, C, H, W = 2, 2, 3, 32, 32
    P = 8
    NP = (H // P) * (W // P)          # 16
    D, Dp = 256, 128

    key = jax.random.PRNGKey(0)
    kx, kp = jax.random.split(key)
    x = jax.random.normal(kx, (B, T, C, H, W), jnp.float32)
    params = init_params(kp, C=C, P=P, D=D, Dp=Dp, NP=NP)

    out = vit_embedder_forward(x, params, patch=P)
    out = jax.block_until_ready(out)
    assert out.shape == (B, T, NP, Dp), out.shape
    assert bool(jnp.all(jnp.isfinite(out)))

    # Tolerance check against the pure-JAX f32 reference (kernel uses bf16
    # operands with f32 accumulation -> ~1e-2 level deviation expected).
    ref = vit_embedder_reference(x, params, patch=P)
    assert bool(jnp.allclose(out, ref, atol=7e-2, rtol=7e-2))

    print("KERNEL_OK")
</pallas_src>

<mosaic_0001>
module attributes {stable_mosaic.version = 11 : i64} {
  func.func @fused_embed_kernel(%arg0: i32, %arg1: memref<64x192xbf16, #tpu.memory_space<vmem>>, %arg2: memref<192x256xbf16, #tpu.memory_space<vmem>>, %arg3: memref<64x256xbf16, #tpu.memory_space<vmem>>, %arg4: memref<256x128xbf16, #tpu.memory_space<vmem>>, %arg5: memref<1x128xf32, #tpu.memory_space<vmem>>, %arg6: memref<64x128xf32, #tpu.memory_space<vmem>>) attributes {dimension_semantics = [#tpu.dimension_semantics<parallel>], iteration_bounds = array<i64: 1>, scalar_prefetch = 0 : i64, scratch_operands = 0 : i64, tpu.core_type = #tpu.core_type<tc>, window_params = [{transform_indices = @transform_0, window_bounds = array<i64: 64, 192>}, {pipeline_mode = #tpu.pipeline_mode<synchronous>, transform_indices = @transform_1, window_bounds = array<i64: 192, 256>}, {pipeline_mode = #tpu.pipeline_mode<synchronous>, transform_indices = @transform_2, window_bounds = array<i64: 64, 256>}, {pipeline_mode = #tpu.pipeline_mode<synchronous>, transform_indices = @transform_3, window_bounds = array<i64: 256, 128>}, {pipeline_mode = #tpu.pipeline_mode<synchronous>, transform_indices = @transform_4, window_bounds = array<i64: 1, 128>}, {transform_indices = @transform_5, window_bounds = array<i64: 64, 128>}]} {
    %c0 = arith.constant 0 : index
    %c0_0 = arith.constant 0 : index
    %0 = vector.load %arg1[%c0, %c0_0] : memref<64x192xbf16, #tpu.memory_space<vmem>>, vector<64x192xbf16>
    %c0_1 = arith.constant 0 : index
    %c0_2 = arith.constant 0 : index
    %1 = vector.load %arg2[%c0_1, %c0_2] : memref<192x256xbf16, #tpu.memory_space<vmem>>, vector<192x256xbf16>
    %cst = arith.constant dense<0.000000e+00> : vector<64x256xf32>
    %2 = tpu.matmul %0, %1, %cst {dimension_numbers = #tpu.dot_dimension_numbers<[1], [0], [0], [1], [0, 0, 1, 1], [], []>} : vector<64x192xbf16>, vector<192x256xbf16>, vector<64x256xf32> -> vector<64x256xf32>
    %c0_3 = arith.constant 0 : index
    %c0_4 = arith.constant 0 : index
    %3 = vector.load %arg3[%c0_3, %c0_4] : memref<64x256xbf16, #tpu.memory_space<vmem>>, vector<64x256xbf16>
    %4 = arith.extf %3 : vector<64x256xbf16> to vector<64x256xf32>
    %5 = arith.addf %2, %4 : vector<64x256xf32>
    %cst_5 = arith.constant dense<0.000000e+00> : vector<64xf32>
    %6 = vector.multi_reduction <add>, %5, %cst_5 [1] : vector<64x256xf32> to vector<64xf32>
    %7 = vector.shape_cast %6 : vector<64xf32> to vector<64x1xf32>
    %cst_6 = arith.constant 2.560000e+02 : f32
    %8 = vector.broadcast %cst_6 : f32 to vector<64x1xf32>
    %9 = arith.divf %7, %8 : vector<64x1xf32>
    %10 = vector.broadcast %9 : vector<64x1xf32> to vector<64x256xf32>
    %11 = arith.subf %5, %10 : vector<64x256xf32>
    %12 = arith.mulf %11, %11 : vector<64x256xf32>
    %cst_7 = arith.constant dense<0.000000e+00> : vector<64xf32>
    %13 = vector.multi_reduction <add>, %12, %cst_7 [1] : vector<64x256xf32> to vector<64xf32>
    %14 = vector.shape_cast %13 : vector<64xf32> to vector<64x1xf32>
    %cst_8 = arith.constant 2.560000e+02 : f32
    %15 = vector.broadcast %cst_8 : f32 to vector<64x1xf32>
    %16 = arith.divf %14, %15 : vector<64x1xf32>
    %17 = vector.broadcast %9 : vector<64x1xf32> to vector<64x256xf32>
    %18 = arith.subf %5, %17 : vector<64x256xf32>
    %cst_9 = arith.constant 9.99999997E-7 : f32
    %19 = vector.broadcast %cst_9 : f32 to vector<64x1xf32>
    %20 = arith.addf %16, %19 : vector<64x1xf32>
    %21 = math.rsqrt %20 : vector<64x1xf32>
    %22 = vector.broadcast %21 : vector<64x1xf32> to vector<64x256xf32>
    %23 = arith.mulf %18, %22 : vector<64x256xf32>
    %24 = arith.truncf %23 : vector<64x256xf32> to vector<64x256xbf16>
    %c0_10 = arith.constant 0 : index
    %c0_11 = arith.constant 0 : index
    %25 = vector.load %arg4[%c0_10, %c0_11] : memref<256x128xbf16, #tpu.memory_space<vmem>>, vector<256x128xbf16>
    %cst_12 = arith.constant dense<0.000000e+00> : vector<64x128xf32>
    %26 = tpu.matmul %24, %25, %cst_12 {dimension_numbers = #tpu.dot_dimension_numbers<[1], [0], [0], [1], [0, 0, 1, 1], [], []>} : vector<64x256xbf16>, vector<256x128xbf16>, vector<64x128xf32> -> vector<64x128xf32>
    %c0_13 = arith.constant 0 : index
    %c0_14 = arith.constant 0 : index
    %27 = vector.load %arg5[%c0_13, %c0_14] : memref<1x128xf32, #tpu.memory_space<vmem>>, vector<1x128xf32>
    %28 = vector.broadcast %27 : vector<1x128xf32> to vector<64x128xf32>
    %29 = arith.addf %26, %28 : vector<64x128xf32>
    %c0_15 = arith.constant 0 : index
    %c0_16 = arith.constant 0 : index
    %30 = vector.load %arg6[%c0_15, %c0_16] : memref<64x128xf32, #tpu.memory_space<vmem>>, vector<64x128xf32>
    tpu.vector_store %arg6[%c0_15, %c0_16], %29 {strides = array<i32>} : memref<64x128xf32, #tpu.memory_space<vmem>>, vector<64x128xf32>,
    return
  }
  func.func @transform_0(%arg0: i32) -> (i32, i32) {
    %c0_i32 = arith.constant 0 : i32
    %c0_i32_0 = arith.constant 0 : i32
    return %arg0, %c0_i32 : i32, i32
  }
  func.func @transform_1(%arg0: i32) -> (i32, i32) {
    %c0_i32 = arith.constant 0 : i32
    %c0_i32_0 = arith.constant 0 : i32
    %c0_i32_1 = arith.constant 0 : i32
    return %c0_i32, %c0_i32_0 : i32, i32
  }
  func.func @transform_2(%arg0: i32) -> (i32, i32) {
    %c0_i32 = arith.constant 0 : i32
    %c0_i32_0 = arith.constant 0 : i32
    %c0_i32_1 = arith.constant 0 : i32
    return %c0_i32, %c0_i32_0 : i32, i32
  }
  func.func @transform_3(%arg0: i32) -> (i32, i32) {
    %c0_i32 = arith.constant 0 : i32
    %c0_i32_0 = arith.constant 0 : i32
    %c0_i32_1 = arith.constant 0 : i32
    return %c0_i32, %c0_i32_0 : i32, i32
  }
  func.func @transform_4(%arg0: i32) -> (i32, i32) {
    %c0_i32 = arith.constant 0 : i32
    %c0_i32_0 = arith.constant 0 : i32
    %c0_i32_1 = arith.constant 0 : i32
    return %c0_i32, %c0_i32_0 : i32, i32
  }
  func.func @transform_5(%arg0: i32) -> (i32, i32) {
    %c0_i32 = arith.constant 0 : i32
    %c0_i32_0 = arith.constant 0 : i32
    return %arg0, %c0_i32 : i32, i32
  }
}

module attributes {stable_mosaic.version = 11 : i64} {
  func.func @fused_embed_kernel(%arg0: i32, %arg1: memref<64x192xbf16, #tpu.memory_space<vmem>>, %arg2: memref<192x256xbf16, #tpu.memory_space<vmem>>, %arg3: memref<64x256xbf16, #tpu.memory_space<vmem>>, %arg4: memref<256x128xbf16, #tpu.memory_space<vmem>>, %arg5: memref<1x128xf32, #tpu.memory_space<vmem>>, %arg6: memref<64x128xf32, #tpu.memory_space<vmem>>) attributes {dimension_semantics = [#tpu.dimension_semantics<parallel>], iteration_bounds = array<i64: 1>, scalar_prefetch = 0 : i64, scratch_operands = 0 : i64, tpu.core_type = #tpu.core_type<tc>, window_params = [{transform_indices = @transform_0, window_bounds = array<i64: 64, 192>}, {pipeline_mode = #tpu.pipeline_mode<synchronous>, transform_indices = @transform_1, window_bounds = array<i64: 192, 256>}, {pipeline_mode = #tpu.pipeline_mode<synchronous>, transform_indices = @transform_2, window_bounds = array<i64: 64, 256>}, {pipeline_mode = #tpu.pipeline_mode<synchronous>, transform_indices = @transform_3, window_bounds = array<i64: 256, 128>}, {pipeline_mode = #tpu.pipeline_mode<synchronous>, transform_indices = @transform_4, window_bounds = array<i64: 1, 128>}, {transform_indices = @transform_5, window_bounds = array<i64: 64, 128>}]} {
    %c0 = arith.constant 0 : index
    %c0_0 = arith.constant 0 : index
    %0 = vector.load %arg1[%c0, %c0_0] : memref<64x192xbf16, #tpu.memory_space<vmem>>, vector<64x192xbf16>
    %c0_1 = arith.constant 0 : index
    %c0_2 = arith.constant 0 : index
    %1 = vector.load %arg2[%c0_1, %c0_2] : memref<192x256xbf16, #tpu.memory_space<vmem>>, vector<192x256xbf16>
    %cst = arith.constant dense<0.000000e+00> : vector<64x256xf32>
    %2 = tpu.matmul %0, %1, %cst {dimension_numbers = #tpu.dot_dimension_numbers<[1], [0], [0], [1], [0, 0, 1, 1], [], []>} : vector<64x192xbf16>, vector<192x256xbf16>, vector<64x256xf32> -> vector<64x256xf32>
    %c0_3 = arith.constant 0 : index
    %c0_4 = arith.constant 0 : index
    %3 = vector.load %arg3[%c0_3, %c0_4] : memref<64x256xbf16, #tpu.memory_space<vmem>>, vector<64x256xbf16>
    %4 = arith.extf %3 : vector<64x256xbf16> to vector<64x256xf32>
    %5 = arith.addf %2, %4 : vector<64x256xf32>
    %cst_5 = arith.constant dense<0.000000e+00> : vector<64xf32>
    %6 = vector.multi_reduction <add>, %5, %cst_5 [1] : vector<64x256xf32> to vector<64xf32>
    %7 = vector.shape_cast %6 : vector<64xf32> to vector<64x1xf32>
    %cst_6 = arith.constant 2.560000e+02 : f32
    %8 = vector.broadcast %cst_6 : f32 to vector<64x1xf32>
    %9 = arith.divf %7, %8 : vector<64x1xf32>
    %10 = vector.broadcast %9 : vector<64x1xf32> to vector<64x256xf32>
    %11 = arith.subf %5, %10 : vector<64x256xf32>
    %12 = arith.mulf %11, %11 : vector<64x256xf32>
    %cst_7 = arith.constant dense<0.000000e+00> : vector<64xf32>
    %13 = vector.multi_reduction <add>, %12, %cst_7 [1] : vector<64x256xf32> to vector<64xf32>
    %14 = vector.shape_cast %13 : vector<64xf32> to vector<64x1xf32>
    %cst_8 = arith.constant 2.560000e+02 : f32
    %15 = vector.broadcast %cst_8 : f32 to vector<64x1xf32>
    %16 = arith.divf %14, %15 : vector<64x1xf32>
    %17 = vector.broadcast %9 : vector<64x1xf32> to vector<64x256xf32>
    %18 = arith.subf %5, %17 : vector<64x256xf32>
    %cst_9 = arith.constant 9.99999997E-7 : f32
    %19 = vector.broadcast %cst_9 : f32 to vector<64x1xf32>
    %20 = arith.addf %16, %19 : vector<64x1xf32>
    %21 = math.rsqrt %20 : vector<64x1xf32>
    %22 = vector.broadcast %21 : vector<64x1xf32> to vector<64x256xf32>
    %23 = arith.mulf %18, %22 : vector<64x256xf32>
    %24 = arith.truncf %23 : vector<64x256xf32> to vector<64x256xbf16>
    %c0_10 = arith.constant 0 : index
    %c0_11 = arith.constant 0 : index
    %25 = vector.load %arg4[%c0_10, %c0_11] : memref<256x128xbf16, #tpu.memory_space<vmem>>, vector<256x128xbf16>
    %cst_12 = arith.constant dense<0.000000e+00> : vector<64x128xf32>
    %26 = tpu.matmul %24, %25, %cst_12 {dimension_numbers = #tpu.dot_dimension_numbers<[1], [0], [0], [1], [0, 0, 1, 1], [], []>} : vector<64x256xbf16>, vector<256x128xbf16>, vector<64x128xf32> -> vector<64x128xf32>
    %c0_13 = arith.constant 0 : index
    %c0_14 = arith.constant 0 : index
    %27 = vector.load %arg5[%c0_13, %c0_14] : memref<1x128xf32, #tpu.memory_space<vmem>>, vector<1x128xf32>
    %28 = vector.broadcast %27 : vector<1x128xf32> to vector<64x128xf32>
    %29 = arith.addf %26, %28 : vector<64x128xf32>
    %c0_15 = arith.constant 0 : index
    %c0_16 = arith.constant 0 : index
    %30 = vector.load %arg6[%c0_15, %c0_16] : memref<64x128xf32, #tpu.memory_space<vmem>>, vector<64x128xf32>
    tpu.vector_store %arg6[%c0_15, %c0_16], %29 {strides = array<i32>} : memref<64x128xf32, #tpu.memory_space<vmem>>, vector<64x128xf32>,
    return
  }
  func.func @transform_0(%arg0: i32) -> (i32, i32) {
    %c0_i32 = arith.constant 0 : i32
    %c0_i32_0 = arith.constant 0 : i32
    return %arg0, %c0_i32 : i32, i32
  }
  func.func @transform_1(%arg0: i32) -> (i32, i32) {
    %c0_i32 = arith.constant 0 : i32
    %c0_i32_0 = arith.constant 0 : i32
    %c0_i32_1 = arith.constant 0 : i32
    return %c0_i32, %c0_i32_0 : i32, i32
  }
  func.func @transform_2(%arg0: i32) -> (i32, i32) {
    %c0_i32 = arith.constant 0 : i32
    %c0_i32_0 = arith.constant 0 : i32
    %c0_i32_1 = arith.constant 0 : i32
    return %c0_i32, %c0_i32_0 : i32, i32
  }
  func.func @transform_3(%arg0: i32) -> (i32, i32) {
    %c0_i32 = arith.constant 0 : i32
    %c0_i32_0 = arith.constant 0 : i32
    %c0_i32_1 = arith.constant 0 : i32
    return %c0_i32, %c0_i32_0 : i32, i32
  }
  func.func @transform_4(%arg0: i32) -> (i32, i32) {
    %c0_i32 = arith.constant 0 : i32
    %c0_i32_0 = arith.constant 0 : i32
    %c0_i32_1 = arith.constant 0 : i32
    return %c0_i32, %c0_i32_0 : i32, i32
  }
  func.func @transform_5(%arg0: i32) -> (i32, i32) {
    %c0_i32 = arith.constant 0 : i32
    %c0_i32_0 = arith.constant 0 : i32
    return %arg0, %c0_i32 : i32, i32
  }
}

</mosaic_0001>

<llo_original>
// kernel: tpu_custom_call.1
$region0: #{tpu_custom_call.1}
  #allocation0 [shape = 'u32[]', space=smem, size = 0x4, offset = 0x4, fixed_abs, tag = 'smem constant byte address 0x4 - core index']
  #allocation1 [shape = 'u32[144,128]{1,0:T(1,128)}', space=vmem, size = 0x12000, scoped, tag = 'internal scratch']
  %s0 = inlined_call_operand.hbm [shape: bf16[64,192], index: 0, kind: input, shape index: {}]
  %s1 = inlined_call_operand.hbm [shape: bf16[192,256], index: 1, kind: input, shape index: {}]
  %s2 = inlined_call_operand.hbm [shape: bf16[64,256], index: 2, kind: input, shape index: {}]
  %s3 = inlined_call_operand.hbm [shape: bf16[256,128], index: 3, kind: input, shape index: {}]
  %s4 = inlined_call_operand.vmem [shape: f32[1,128], index: 4, kind: input, shape index: {}]
  %s5 = inlined_call_operand.hbm [shape: f32[64,128], index: 5, kind: output, shape index: {}]
  %s6 = sld [smem:[#allocation0]]
  $region46: #{tpu_custom_call.1} parent=0
    _
  %s8 = ssub.s32 1, %s6
  %s9 = scalar_select 0, %s8, %s6
  $region1: #{tpu_custom_call.1} parent=0
    #allocation2 [shape = 'u8[32768]{0}', space=vmem, size = 0x8000, scoped, tag = 'input window, operand 0, single buffered']
    #allocation3 [shape = 's32[1]{0}', space=sflag, size = 0x4, scoped, tag = 'scoped memory for tpu_custom_call.1']
    #allocation4 [shape = 's32[1]{0}', space=sflag, size = 0x4, scoped, tag = 'scoped memory for tpu_custom_call.1']
    #allocation5 [shape = 'u8[98304]{0}', space=vmem, size = 0x18000, scoped, tag = 'input window, operand 1, single buffered']
    #allocation6 [shape = 's32[1]{0}', space=sflag, size = 0x4, scoped, tag = 'scoped memory for tpu_custom_call.1']
    #allocation7 [shape = 'u8[32768]{0}', space=vmem, size = 0x8000, scoped, tag = 'input window, operand 2, single buffered']
    #allocation8 [shape = 'u8[65536]{0}', space=vmem, size = 0x10000, scoped, tag = 'input window, operand 3, single buffered']
    #allocation9 [shape = 's32[1]{0}', space=sflag, size = 0x4, scoped, tag = 'scoped memory for tpu_custom_call.1']
    #allocation10 [shape = 'u8[32768]{0}', space=vmem, size = 0x8000, scoped, tag = 'output window, operand 0, single buffered']
    %10 = vsyncpa [#allocation3], 0
    %11 = vsyncpa [#allocation6], 0
    %12 = vsyncpa [#allocation9], 0
    %13 = vsyncpa [#allocation4], 0
    // Predicated region
    $region2: #{tpu_custom_call.1} parent=1 // pred_check
      _
    $region3: #{tpu_custom_call.1} parent=1 // pred_check_branch
      %15 = sbr.rel (0) target = $region5
    $region4: #{tpu_custom_call.1} parent=1 // pred_region
      %s17 = ssub.s32 1024, 1024
      %18 = vsyncadd [#allocation3], %s17
      %s19 = sshll.u32 [#allocation2], 4
      %s20 = int_to_ptr.vmem [resolvable:$true] %s19
      %25 = dma.hbm_to_vmem [thread:$0]  %s0, 1024, %s20, [#allocation3], 128, 128, 8
    $region5: #{tpu_custom_call.1} parent=1 // pred_fallthru
      _
    // Predicated region
    $region6: #{tpu_custom_call.1} parent=1 // pred_check
      _
    $region7: #{tpu_custom_call.1} parent=1 // pred_check_branch
      %27 = sbr.rel (0) target = $region9
    $region8: #{tpu_custom_call.1} parent=1 // pred_region
      %s29 = ssub.s32 3072, 3072
      %30 = vsyncadd [#allocation6], %s29
      %s31 = sshll.u32 [#allocation5], 4
      %s32 = int_to_ptr.vmem [resolvable:$true] %s31
      %37 = dma.hbm_to_vmem [thread:$0]  %s1, 3072, %s32, [#allocation6], 128, 128, 8
    $region9: #{tpu_custom_call.1} parent=1 // pred_fallthru
      _
    // Predicated region
    $region10: #{tpu_custom_call.1} parent=1 // pred_check
      _
    $region11: #{tpu_custom_call.1} parent=1 // pred_check_branch
      %39 = sbr.rel (0) target = $region13
    $region12: #{tpu_custom_call.1} parent=1 // pred_region
      %s41 = ssub.s32 1024, 1024
      %42 = vsyncadd [#allocation6], %s41
      %s43 = sshll.u32 [#allocation7], 4
      %s44 = int_to_ptr.vmem [resolvable:$true] %s43
      %49 = dma.hbm_to_vmem [thread:$0]  %s2, 1024, %s44, [#allocation6], 128, 128, 8
    $region13: #{tpu_custom_call.1} parent=1 // pred_fallthru
      _
    // Predicated region
    $region14: #{tpu_custom_call.1} parent=1 // pred_check
      _
    $region15: #{tpu_custom_call.1} parent=1 // pred_check_branch
      %51 = sbr.rel (0) target = $region17
    $region16: #{tpu_custom_call.1} parent=1 // pred_region
      %s53 = ssub.s32 2048, 2048
      %54 = vsyncadd [#allocation9], %s53
      %s55 = sshll.u32 [#allocation8], 4
      %s56 = int_to_ptr.vmem [resolvable:$true] %s55
      %61 = dma.hbm_to_vmem [thread:$0]  %s3, 2048, %s56, [#allocation9], 64, 64, 4
    $region17: #{tpu_custom_call.1} parent=1 // pred_fallthru
      _
    // Predicated region
    $region18: #{tpu_custom_call.1} parent=1 // pred_check
      _
    $region19: #{tpu_custom_call.1} parent=1 // pred_check_branch
      %63 = sbr.rel (0) target = $region21
    $region20: #{tpu_custom_call.1} parent=1 // pred_region
      _
    $region21: #{tpu_custom_call.1} parent=1 // pred_fallthru
      _
    // Predicated region
    $region22: #{tpu_custom_call.1} parent=1 // pred_check
      _
    $region23: #{tpu_custom_call.1} parent=1 // pred_check_branch
      %65 = sbr.rel (0) target = $region25
    $region24: #{tpu_custom_call.1} parent=1 // pred_region
      %66 = dma.done [#allocation3], 1024
    $region25: #{tpu_custom_call.1} parent=1 // pred_fallthru
      _
    // Predicated region
    $region26: #{tpu_custom_call.1} parent=1 // pred_check
      _
    $region27: #{tpu_custom_call.1} parent=1 // pred_check_branch
      %68 = sbr.rel (0) target = $region29
    $region28: #{tpu_custom_call.1} parent=1 // pred_region
      %69 = dma.done [#allocation6], 3072
    $region29: #{tpu_custom_call.1} parent=1 // pred_fallthru
      _
    // Predicated region
    $region30: #{tpu_custom_call.1} parent=1 // pred_check
      _
    $region31: #{tpu_custom_call.1} parent=1 // pred_check_branch
      %71 = sbr.rel (0) target = $region33
    $region32: #{tpu_custom_call.1} parent=1 // pred_region
      %72 = dma.done [#allocation6], 1024
    $region33: #{tpu_custom_call.1} parent=1 // pred_fallthru
      _
    // Predicated region
    $region34: #{tpu_custom_call.1} parent=1 // pred_check
      _
    $region35: #{tpu_custom_call.1} parent=1 // pred_check_branch
      %74 = sbr.rel (0) target = $region37
    $region36: #{tpu_custom_call.1} parent=1 // pred_region
      %75 = dma.done [#allocation9], 2048
    $region37: #{tpu_custom_call.1} parent=1 // pred_fallthru
      _
    %v77 = vld [vmem:[#allocation2] sm:$0xff]
    %v78 = vld [vmem:[#allocation2 + $0x8] sm:$0xff]
    %v79 = vld [vmem:[#allocation2 + $0x10] sm:$0xff]
    %v80 = vld [vmem:[#allocation2 + $0x18] sm:$0xff]
    %v81 = vld [vmem:[#allocation2 + $0x20] sm:$0xff]
    %v82 = vld [vmem:[#allocation2 + $0x28] sm:$0xff]
    %v83 = vld [vmem:[#allocation2 + $0x30] sm:$0xff]
    %v84 = vld [vmem:[#allocation2 + $0x38] sm:$0xff]
    %v85 = vld [vmem:[#allocation5] sm:$0xff]
    %v86 = vld [vmem:[#allocation5 + $0x8] sm:$0xff]
    %v87 = vld [vmem:[#allocation5 + $0x10] sm:$0xff]
    %v88 = vld [vmem:[#allocation5 + $0x18] sm:$0xff]
    %v89 = vld [vmem:[#allocation5 + $0x20] sm:$0xff]
    %v90 = vld [vmem:[#allocation5 + $0x28] sm:$0xff]
    %v91 = vld [vmem:[#allocation5 + $0x30] sm:$0xff]
    %v92 = vld [vmem:[#allocation5 + $0x38] sm:$0xff]
    %v93 = vld [vmem:[#allocation5 + $0x40] sm:$0xff]
    %v94 = vld [vmem:[#allocation5 + $0x48] sm:$0xff]
    %v95 = vld [vmem:[#allocation5 + $0x50] sm:$0xff]
    %v96 = vld [vmem:[#allocation5 + $0x58] sm:$0xff]
    %v97 = vld [vmem:[#allocation5 + $0x60] sm:$0xff]
    %v98 = vld [vmem:[#allocation5 + $0x68] sm:$0xff]
    %v99 = vld [vmem:[#allocation5 + $0x70] sm:$0xff]
    %v100 = vld [vmem:[#allocation5 + $0x78] sm:$0xff]
    %v101 = vld [vmem:[#allocation5 + $0x80] sm:$0xff]
    %v102 = vld [vmem:[#allocation5 + $0x88] sm:$0xff]
    %v103 = vld [vmem:[#allocation5 + $0x90] sm:$0xff]
    %v104 = vld [vmem:[#allocation5 + $0x98] sm:$0xff]
    %v105 = vld [vmem:[#allocation5 + $0xa0] sm:$0xff]
    %v106 = vld [vmem:[#allocation5 + $0xa8] sm:$0xff]
    %v107 = vld [vmem:[#allocation5 + $0xb0] sm:$0xff]
    %v108 = vld [vmem:[#allocation5 + $0xb8] sm:$0xff]
    %v109 = vld [vmem:[#allocation7] sm:$0xff]
    %v110 = vld [vmem:[#allocation7 + $0x8] sm:$0xff]
    %v111 = vld [vmem:[#allocation7 + $0x10] sm:$0xff]
    %v112 = vld [vmem:[#allocation7 + $0x18] sm:$0xff]
    %v113 = vld [vmem:[#allocation7 + $0x20] sm:$0xff]
    %v114 = vld [vmem:[#allocation7 + $0x28] sm:$0xff]
    %v115 = vld [vmem:[#allocation7 + $0x30] sm:$0xff]
    %v116 = vld [vmem:[#allocation7 + $0x38] sm:$0xff]
    %v117 = vunpack.c.l.bf16 %v109
    %v118 = vunpack.c.h.bf16 %v109
    %v119 = vunpack.c.l.bf16 %v110
    %v120 = vunpack.c.h.bf16 %v110
    %v121 = vunpack.c.l.bf16 %v111
    %v122 = vunpack.c.h.bf16 %v111
    %v123 = vunpack.c.l.bf16 %v112
    %v124 = vunpack.c.h.bf16 %v112
    %v125 = vunpack.c.l.bf16 %v113
    %v126 = vunpack.c.h.bf16 %v113
    %v127 = vunpack.c.l.bf16 %v114
    %v128 = vunpack.c.h.bf16 %v114
    %v129 = vunpack.c.l.bf16 %v115
    %v130 = vunpack.c.h.bf16 %v115
    %v131 = vunpack.c.l.bf16 %v116
    %v132 = vunpack.c.h.bf16 %v116
    %v141 = vunpack.c.l.b16 %v77
    %v142 = vunpack.c.h.b16 %v77
    %v143 = vunpack.c.l.b16 %v78
    %v144 = vunpack.c.h.b16 %v78
    %v145 = vunpack.c.l.b16 %v79
    %v146 = vunpack.c.h.b16 %v79
    %v147 = vunpack.c.l.b16 %v80
    %v148 = vunpack.c.h.b16 %v80
    %v149 = vunpack.c.l.b16 %v81
    %v150 = vunpack.c.h.b16 %v81
    %v151 = vunpack.c.l.b16 %v82
    %v152 = vunpack.c.h.b16 %v82
    %v153 = vunpack.c.l.b16 %v83
    %v154 = vunpack.c.h.b16 %v83
    %v155 = vunpack.c.l.b16 %v84
    %v156 = vunpack.c.h.b16 %v84
    %v157 = vpack.c.b16 %v143, %v141
    %v158 = vpack.c.b16 %v144, %v142
    %v159 = vpack.c.b16 %v147, %v145
    %v160 = vpack.c.b16 %v148, %v146
    %v161 = vpack.c.b16 %v151, %v149
    %v162 = vpack.c.b16 %v152, %v150
    %v163 = vpack.c.b16 %v155, %v153
    %v164 = vpack.c.b16 %v156, %v154
    %v193 = vunpack.c.l.b16 %v85
    %v194 = vunpack.c.h.b16 %v85
    %v195 = vunpack.c.l.b16 %v86
    %v196 = vunpack.c.h.b16 %v86
    %v197 = vunpack.c.l.b16 %v87
    %v198 = vunpack.c.h.b16 %v87
    %v199 = vunpack.c.l.b16 %v88
    %v200 = vunpack.c.h.b16 %v88
    %v201 = vunpack.c.l.b16 %v89
    %v202 = vunpack.c.h.b16 %v89
    %v203 = vunpack.c.l.b16 %v90
    %v204 = vunpack.c.h.b16 %v90
    %v205 = vunpack.c.l.b16 %v91
    %v206 = vunpack.c.h.b16 %v91
    %v207 = vunpack.c.l.b16 %v92
    %v208 = vunpack.c.h.b16 %v92
    %v209 = vunpack.c.l.b16 %v93
    %v210 = vunpack.c.h.b16 %v93
    %v211 = vunpack.c.l.b16 %v94
    %v212 = vunpack.c.h.b16 %v94
    %v213 = vunpack.c.l.b16 %v95
    %v214 = vunpack.c.h.b16 %v95
    %v215 = vunpack.c.l.b16 %v96
    %v216 = vunpack.c.h.b16 %v96
    %v217 = vunpack.c.l.b16 %v97
    %v218 = vunpack.c.h.b16 %v97
    %v219 = vunpack.c.l.b16 %v98
    %v220 = vunpack.c.h.b16 %v98
    %v221 = vunpack.c.l.b16 %v99
    %v222 = vunpack.c.h.b16 %v99
    %v223 = vunpack.c.l.b16 %v100
    %v224 = vunpack.c.h.b16 %v100
    %v225 = vunpack.c.l.b16 %v101
    %v226 = vunpack.c.h.b16 %v101
    %v227 = vunpack.c.l.b16 %v102
    %v228 = vunpack.c.h.b16 %v102
    %v229 = vunpack.c.l.b16 %v103
    %v230 = vunpack.c.h.b16 %v103
    %v231 = vunpack.c.l.b16 %v104
    %v232 = vunpack.c.h.b16 %v104
    %v233 = vunpack.c.l.b16 %v105
    %v234 = vunpack.c.h.b16 %v105
    %v235 = vunpack.c.l.b16 %v106
    %v236 = vunpack.c.h.b16 %v106
    %v237 = vunpack.c.l.b16 %v107
    %v238 = vunpack.c.h.b16 %v107
    %v239 = vunpack.c.l.b16 %v108
    %v240 = vunpack.c.h.b16 %v108
    %v241 = vpack.c.b16 %v195, %v193
    %v242 = vpack.c.b16 %v196, %v194
    %v243 = vpack.c.b16 %v199, %v197
    %v244 = vpack.c.b16 %v200, %v198
    %v245 = vpack.c.b16 %v203, %v201
    %v246 = vpack.c.b16 %v204, %v202
    %v247 = vpack.c.b16 %v207, %v205
    %v248 = vpack.c.b16 %v208, %v206
    %v249 = vpack.c.b16 %v211, %v209
    %v250 = vpack.c.b16 %v212, %v210
    %v251 = vpack.c.b16 %v215, %v213
    %v252 = vpack.c.b16 %v216, %v214
    %v253 = vpack.c.b16 %v219, %v217
    %v254 = vpack.c.b16 %v220, %v218
    %v255 = vpack.c.b16 %v223, %v221
    %v256 = vpack.c.b16 %v224, %v222
    %v257 = vpack.c.b16 %v227, %v225
    %v258 = vpack.c.b16 %v228, %v226
    %v259 = vpack.c.b16 %v231, %v229
    %v260 = vpack.c.b16 %v232, %v230
    %v261 = vpack.c.b16 %v235, %v233
    %v262 = vpack.c.b16 %v236, %v234
    %v263 = vpack.c.b16 %v239, %v237
    %v264 = vpack.c.b16 %v240, %v238
    %vm289 = vcmask 523264
    %v291 = vsel %vm289, %v158, 0
    %v294 = vsel %vm289, %v160, 0
    %v297 = vsel %vm289, %v162, 0
    %v300 = vsel %vm289, %v164, 0
    %302 = vmatprep.subr.bf16.mxu0 %v256
    %303 = vmatpush1.bf16.msra.mxu0 %v255
    %304 = vmatprep.subr.bf16.mxu0 %v254
    %305 = vmatpush1.bf16.msra.mxu0 %v253
    %306 = vmatprep.subr.bf16.mxu0 %v252
    %307 = vmatpush1.bf16.msra.mxu0 %v251
    %308 = vmatprep.subr.bf16.mxu0 %v250
    %309 = vmatpush1.bf16.msra.mxu0 %v249
    %310 = vmatprep.subr.bf16.mxu0 %v248
    %311 = vmatpush1.bf16.msra.mxu0 %v247
    %312 = vmatprep.subr.bf16.mxu0 %v246
    %313 = vmatpush1.bf16.msra.mxu0 %v245
    %314 = vmatprep.subr.bf16.mxu0 %v244
    %315 = vmatpush1.bf16.msra.mxu0 %v243
    %316 = vmatprep.subr.bf16.mxu0 %v242
    %317 = vmatpush1.bf16.msra.mxu0 %v241
    %318 = vmatprep.subr.bf16.mxu0 0
    %319 = vmatpush2.bf16.msra.mxu0 0
    %320 = vmatprep.subr.bf16.mxu0 0
    %321 = vmatpush2.bf16.msra.mxu0 0
    %322 = vmatprep.subr.bf16.mxu0 0
    %323 = vmatpush2.bf16.msra.mxu0 0
    %324 = vmatprep.subr.bf16.mxu0 0
    %325 = vmatpush2.bf16.msra.mxu0 0
    %326 = vmatprep.subr.bf16.mxu0 %v264
    %327 = vmatpush2.bf16.msra.mxu0 %v263
    %328 = vmatprep.subr.bf16.mxu0 %v262
    %329 = vmatpush2.bf16.msra.mxu0 %v261
    %330 = vmatprep.subr.bf16.mxu0 %v260
    %331 = vmatpush2.bf16.msra.mxu0 %v259
    %332 = vmatprep.subr.bf16.mxu0 %v258
    %333 = vmatpush2.bf16.msra.mxu0 %v257
    %334 = vmatprep.mubr.bf16.mxu0 %v291
    %335 = vmatmul.mubr.bf16.gmra.mxu0 %v157
    %v336 = vpop.f32.mrf.mxu0
    %v337 = vadd.f32 %v117, %v336
    %v338 = vpop.f32.mrf.mxu0
    %v339 = vadd.f32 %v118, %v338
    %v340 = vpop.f32.mrf.mxu0
    %v341 = vadd.f32 %v119, %v340
    %v342 = vpop.f32.mrf.mxu0
    %v343 = vadd.f32 %v120, %v342
    %344 = vmatprep.mubr.bf16.mxu0 %v294
    %345 = vmatmul.mubr.bf16.gmra.mxu0 %v159
    %v346 = vpop.f32.mrf.mxu0
    %v347 = vadd.f32 %v121, %v346
    %v348 = vpop.f32.mrf.mxu0
    %v349 = vadd.f32 %v122, %v348
    %v350 = vpop.f32.mrf.mxu0
    %v351 = vadd.f32 %v123, %v350
    %v352 = vpop.f32.mrf.mxu0
    %v353 = vadd.f32 %v124, %v352
    %354 = vmatprep.mubr.bf16.mxu0 %v297
    %355 = vmatmul.mubr.bf16.gmra.mxu0 %v161
    %v356 = vpop.f32.mrf.mxu0
    %v357 = vadd.f32 %v125, %v356
    %v358 = vpop.f32.mrf.mxu0
    %v359 = vadd.f32 %v126, %v358
    %v360 = vpop.f32.mrf.mxu0
    %v361 = vadd.f32 %v127, %v360
    %v362 = vpop.f32.mrf.mxu0
    %v363 = vadd.f32 %v128, %v362
    %364 = vmatprep.mubr.bf16.mxu0 %v300
    %365 = vmatmul.mubr.bf16.gmra.mxu0 %v163
    %v366 = vpop.f32.mrf.mxu0
    %v367 = vadd.f32 %v129, %v366
    %v368 = vpop.f32.mrf.mxu0
    %v369 = vadd.f32 %v130, %v368
    %v370 = vpop.f32.mrf.mxu0
    %v371 = vadd.f32 %v131, %v370
    %v372 = vpop.f32.mrf.mxu0
    %v373 = vadd.f32 %v132, %v372
    %374 = vdwg.mxu0
    %v375 = vadd.f32 %v337, %v339
    %376 = vadd.xlane.f32.xlu0 %v375
    %v377 = vpop.xlane.xlu0 %376
    %v378 = vadd.f32 %v341, %v343
    %379 = vadd.xlane.f32.xlu0 %v378
    %v380 = vpop.xlane.xlu0 %379
    %v381 = vadd.f32 %v347, %v349
    %382 = vadd.xlane.f32.xlu0 %v381
    %v383 = vpop.xlane.xlu0 %382
    %v384 = vadd.f32 %v351, %v353
    %385 = vadd.xlane.f32.xlu0 %v384
    %v386 = vpop.xlane.xlu0 %385
    %v387 = vadd.f32 %v357, %v359
    %388 = vadd.xlane.f32.xlu0 %v387
    %v389 = vpop.xlane.xlu0 %388
    %v390 = vadd.f32 %v361, %v363
    %391 = vadd.xlane.f32.xlu0 %v390
    %v392 = vpop.xlane.xlu0 %391
    %v393 = vadd.f32 %v367, %v369
    %394 = vadd.xlane.f32.xlu0 %v393
    %v395 = vpop.xlane.xlu0 %394
    %v396 = vadd.f32 %v371, %v373
    %397 = vadd.xlane.f32.xlu0 %v396
    %v398 = vpop.xlane.xlu0 %397
    %v399 = vrcp.pop 256.0
    %v400 = vmul.f32 %v377, %v399
    %v401 = vmul.f32 %v380, %v399
    %v402 = vmul.f32 %v383, %v399
    %v403 = vmul.f32 %v386, %v399
    %v404 = vmul.f32 %v389, %v399
    %v405 = vmul.f32 %v392, %v399
    %v406 = vmul.f32 %v395, %v399
    %v407 = vmul.f32 %v398, %v399
    %v408 = vsub.f32 %v337, %v400
    %v409 = vsub.f32 %v339, %v400
    %v410 = vsub.f32 %v341, %v401
    %v411 = vsub.f32 %v343, %v401
    %v412 = vsub.f32 %v347, %v402
    %v413 = vsub.f32 %v349, %v402
    %v414 = vsub.f32 %v351, %v403
    %v415 = vsub.f32 %v353, %v403
    %v416 = vsub.f32 %v357, %v404
    %v417 = vsub.f32 %v359, %v404
    %v418 = vsub.f32 %v361, %v405
    %v419 = vsub.f32 %v363, %v405
    %v420 = vsub.f32 %v367, %v406
    %v421 = vsub.f32 %v369, %v406
    %v422 = vsub.f32 %v371, %v407
    %v423 = vsub.f32 %v373, %v407
    %v424 = vmul.f32 %v408, %v408
    %v425 = vmul.f32 %v409, %v409
    %v426 = vmul.f32 %v410, %v410
    %v427 = vmul.f32 %v411, %v411
    %v428 = vmul.f32 %v412, %v412
    %v429 = vmul.f32 %v413, %v413
    %v430 = vmul.f32 %v414, %v414
    %v431 = vmul.f32 %v415, %v415
    %v432 = vmul.f32 %v416, %v416
    %v433 = vmul.f32 %v417, %v417
    %v434 = vmul.f32 %v418, %v418
    %v435 = vmul.f32 %v419, %v419
    %v436 = vmul.f32 %v420, %v420
    %v437 = vmul.f32 %v421, %v421
    %v438 = vmul.f32 %v422, %v422
    %v439 = vmul.f32 %v423, %v423
    %v440 = vadd.f32 %v424, %v425
    %441 = vadd.xlane.f32.xlu0 %v440
    %v442 = vpop.xlane.xlu0 %441
    %v443 = vadd.f32 %v426, %v427
    %444 = vadd.xlane.f32.xlu0 %v443
    %v445 = vpop.xlane.xlu0 %444
    %v446 = vadd.f32 %v428, %v429
    %447 = vadd.xlane.f32.xlu0 %v446
    %v448 = vpop.xlane.xlu0 %447
    %v449 = vadd.f32 %v430, %v431
    %450 = vadd.xlane.f32.xlu0 %v449
    %v451 = vpop.xlane.xlu0 %450
    %v452 = vadd.f32 %v432, %v433
    %453 = vadd.xlane.f32.xlu0 %v452
    %v454 = vpop.xlane.xlu0 %453
    %v455 = vadd.f32 %v434, %v435
    %456 = vadd.xlane.f32.xlu0 %v455
    %v457 = vpop.xlane.xlu0 %456
    %v458 = vadd.f32 %v436, %v437
    %459 = vadd.xlane.f32.xlu0 %v458
    %v460 = vpop.xlane.xlu0 %459
    %v461 = vadd.f32 %v438, %v439
    %462 = vadd.xlane.f32.xlu0 %v461
    %v463 = vpop.xlane.xlu0 %462
    %v464 = vmul.f32 %v442, %v399
    %v465 = vmul.f32 %v445, %v399
    %v466 = vmul.f32 %v448, %v399
    %v467 = vmul.f32 %v451, %v399
    %v468 = vmul.f32 %v454, %v399
    %v469 = vmul.f32 %v457, %v399
    %v470 = vmul.f32 %v460, %v399
    %v471 = vmul.f32 %v463, %v399
    %v472 = vadd.f32 %v464, 1e-06
    %v473 = vadd.f32 %v465, 1e-06
    %v474 = vadd.f32 %v466, 1e-06
    %v475 = vadd.f32 %v467, 1e-06
    %v476 = vadd.f32 %v468, 1e-06
    %v477 = vadd.f32 %v469, 1e-06
    %v478 = vadd.f32 %v470, 1e-06
    %v479 = vadd.f32 %v471, 1e-06
    %v480 = vrsqrt.pop %v472
    %v481 = vrsqrt.pop %v473
    %v482 = vrsqrt.pop %v474
    %v483 = vrsqrt.pop %v475
    %v484 = vrsqrt.pop %v476
    %v485 = vrsqrt.pop %v477
    %v486 = vrsqrt.pop %v478
    %v487 = vrsqrt.pop %v479
    %v488 = vmul.f32 %v408, %v480
    %v489 = vmul.f32 %v409, %v480
    %v490 = vmul.f32 %v410, %v481
    %v491 = vmul.f32 %v411, %v481
    %v492 = vmul.f32 %v412, %v482
    %v493 = vmul.f32 %v413, %v482
    %v494 = vmul.f32 %v414, %v483
    %v495 = vmul.f32 %v415, %v483
    %v496 = vmul.f32 %v416, %v484
    %v497 = vmul.f32 %v417, %v484
    %v498 = vmul.f32 %v418, %v485
    %v499 = vmul.f32 %v419, %v485
    %v500 = vmul.f32 %v420, %v486
    %v501 = vmul.f32 %v421, %v486
    %v502 = vmul.f32 %v422, %v487
    %v503 = vmul.f32 %v423, %v487
    %v504 = vpack.c.bf16 %v490, %v488
    %v505 = vpack.c.bf16 %v491, %v489
    %v506 = vpack.c.bf16 %v494, %v492
    %v507 = vpack.c.bf16 %v495, %v493
    %v508 = vpack.c.bf16 %v498, %v496
    %v509 = vpack.c.bf16 %v499, %v497
    %v510 = vpack.c.bf16 %v502, %v500
    %v511 = vpack.c.bf16 %v503, %v501
    %v512 = vld [vmem:[#allocation8] sm:$0xf]
    %v513 = vld [vmem:[#allocation8 + $0x4] sm:$0xf]
    %v514 = vld [vmem:[#allocation8 + $0x8] sm:$0xf]
    %v515 = vld [vmem:[#allocation8 + $0xc] sm:$0xf]
    %v516 = vld [vmem:[#allocation8 + $0x10] sm:$0xf]
    %v517 = vld [vmem:[#allocation8 + $0x14] sm:$0xf]
    %v518 = vld [vmem:[#allocation8 + $0x18] sm:$0xf]
    %v519 = vld [vmem:[#allocation8 + $0x1c] sm:$0xf]
    %v520 = vld [vmem:[#allocation8 + $0x20] sm:$0xf]
    %v521 = vld [vmem:[#allocation8 + $0x24] sm:$0xf]
    %v522 = vld [vmem:[#allocation8 + $0x28] sm:$0xf]
    %v523 = vld [vmem:[#allocation8 + $0x2c] sm:$0xf]
    %v524 = vld [vmem:[#allocation8 + $0x30] sm:$0xf]
    %v525 = vld [vmem:[#allocation8 + $0x34] sm:$0xf]
    %v526 = vld [vmem:[#allocation8 + $0x38] sm:$0xf]
    %v527 = vld [vmem:[#allocation8 + $0x3c] sm:$0xf]
    %v528 = vld [vmem:[#allocation8 + $0x40] sm:$0xf]
    %v529 = vld [vmem:[#allocation8 + $0x44] sm:$0xf]
    %v530 = vld [vmem:[#allocation8 + $0x48] sm:$0xf]
    %v531 = vld [vmem:[#allocation8 + $0x4c] sm:$0xf]
    %v532 = vld [vmem:[#allocation8 + $0x50] sm:$0xf]
    %v533 = vld [vmem:[#allocation8 + $0x54] sm:$0xf]
    %v534 = vld [vmem:[#allocation8 + $0x58] sm:$0xf]
    %v535 = vld [vmem:[#allocation8 + $0x5c] sm:$0xf]
    %v536 = vld [vmem:[#allocation8 + $0x60] sm:$0xf]
    %v537 = vld [vmem:[#allocation8 + $0x64] sm:$0xf]
    %v538 = vld [vmem:[#allocation8 + $0x68] sm:$0xf]
    %v539 = vld [vmem:[#allocation8 + $0x6c] sm:$0xf]
    %v540 = vld [vmem:[#allocation8 + $0x70] sm:$0xf]
    %v541 = vld [vmem:[#allocation8 + $0x74] sm:$0xf]
    %v542 = vld [vmem:[#allocation8 + $0x78] sm:$0xf]
    %v543 = vld [vmem:[#allocation8 + $0x7c] sm:$0xf]
    %v544 = vld [vmem:[%s4] sm:$0x1]
    %v546 = vlaneseq
    %v547 = vshrl.u32 %v546, 7
    %v548 = vsub.s32 0, %v547
    %v549 = vrot.slane %v544, %v548
    %v583 = vunpack.c.l.b16 %v512
    %v584 = vunpack.c.l.b16 %v513
    %v585 = vunpack.c.l.b16 %v514
    %v586 = vunpack.c.l.b16 %v515
    %v587 = vunpack.c.l.b16 %v516
    %v588 = vunpack.c.l.b16 %v517
    %v589 = vunpack.c.l.b16 %v518
    %v590 = vunpack.c.l.b16 %v519
    %v591 = vunpack.c.l.b16 %v520
    %v592 = vunpack.c.l.b16 %v521
    %v593 = vunpack.c.l.b16 %v522
    %v594 = vunpack.c.l.b16 %v523
    %v595 = vunpack.c.l.b16 %v524
    %v596 = vunpack.c.l.b16 %v525
    %v597 = vunpack.c.l.b16 %v526
    %v598 = vunpack.c.l.b16 %v527
    %v599 = vunpack.c.l.b16 %v528
    %v600 = vunpack.c.l.b16 %v529
    %v601 = vunpack.c.l.b16 %v530
    %v602 = vunpack.c.l.b16 %v531
    %v603 = vunpack.c.l.b16 %v532
    %v604 = vunpack.c.l.b16 %v533
    %v605 = vunpack.c.l.b16 %v534
    %v606 = vunpack.c.l.b16 %v535
    %v607 = vunpack.c.l.b16 %v536
    %v608 = vunpack.c.l.b16 %v537
    %v609 = vunpack.c.l.b16 %v538
    %v610 = vunpack.c.l.b16 %v539
    %v611 = vunpack.c.l.b16 %v540
    %v612 = vunpack.c.l.b16 %v541
    %v613 = vunpack.c.l.b16 %v542
    %v614 = vunpack.c.l.b16 %v543
    %v615 = vpack.c.b16 %v584, %v583
    %v616 = vpack.c.b16 %v586, %v585
    %v617 = vpack.c.b16 %v588, %v587
    %v618 = vpack.c.b16 %v590, %v589
    %v619 = vpack.c.b16 %v592, %v591
    %v620 = vpack.c.b16 %v594, %v593
    %v621 = vpack.c.b16 %v596, %v595
    %v622 = vpack.c.b16 %v598, %v597
    %v623 = vpack.c.b16 %v600, %v599
    %v624 = vpack.c.b16 %v602, %v601
    %v625 = vpack.c.b16 %v604, %v603
    %v626 = vpack.c.b16 %v606, %v605
    %v627 = vpack.c.b16 %v608, %v607
    %v628 = vpack.c.b16 %v610, %v609
    %v629 = vpack.c.b16 %v612, %v611
    %v630 = vpack.c.b16 %v614, %v613
    %647 = vmatprep.subr.bf16.mxu0 0
    %648 = vmatpush1.bf16.msra.mxu0 %v622
    %649 = vmatprep.subr.bf16.mxu0 0
    %650 = vmatpush1.bf16.msra.mxu0 %v621
    %651 = vmatprep.subr.bf16.mxu0 0
    %652 = vmatpush1.bf16.msra.mxu0 %v620
    %653 = vmatprep.subr.bf16.mxu0 0
    %654 = vmatpush1.bf16.msra.mxu0 %v619
    %655 = vmatprep.subr.bf16.mxu0 0
    %656 = vmatpush1.bf16.msra.mxu0 %v618
    %657 = vmatprep.subr.bf16.mxu0 0
    %658 = vmatpush1.bf16.msra.mxu0 %v617
    %659 = vmatprep.subr.bf16.mxu0 0
    %660 = vmatpush1.bf16.msra.mxu0 %v616
    %661 = vmatprep.subr.bf16.mxu0 0
    %662 = vmatpush1.bf16.msra.mxu0 %v615
    %663 = vmatprep.subr.bf16.mxu0 0
    %664 = vmatpush2.bf16.msra.mxu0 %v630
    %665 = vmatprep.subr.bf16.mxu0 0
    %666 = vmatpush2.bf16.msra.mxu0 %v629
    %667 = vmatprep.subr.bf16.mxu0 0
    %668 = vmatpush2.bf16.msra.mxu0 %v628
    %669 = vmatprep.subr.bf16.mxu0 0
    %670 = vmatpush2.bf16.msra.mxu0 %v627
    %671 = vmatprep.subr.bf16.mxu0 0
    %672 = vmatpush2.bf16.msra.mxu0 %v626
    %673 = vmatprep.subr.bf16.mxu0 0
    %674 = vmatpush2.bf16.msra.mxu0 %v625
    %675 = vmatprep.subr.bf16.mxu0 0
    %676 = vmatpush2.bf16.msra.mxu0 %v624
    %677 = vmatprep.subr.bf16.mxu0 0
    %678 = vmatpush2.bf16.msra.mxu0 %v623
    %679 = vmatprep.mubr.bf16.mxu0 %v505
    %680 = vmatmul.mubr.bf16.gmra.mxu0 %v504
    %v681 = vpop.f32.mrf.mxu0
    %v682 = vadd.f32 %v549, %v681
    %v683 = vpop.f32.mrf.mxu0
    %v684 = vpop.f32.mrf.mxu0
    %v685 = vadd.f32 %v549, %v684
    %v686 = vpop.f32.mrf.mxu0
    %687 = vmatprep.mubr.bf16.mxu0 %v507
    %688 = vmatmul.mubr.bf16.gmra.mxu0 %v506
    %v689 = vpop.f32.mrf.mxu0
    %v690 = vadd.f32 %v549, %v689
    %v691 = vpop.f32.mrf.mxu0
    %v692 = vpop.f32.mrf.mxu0
    %v693 = vadd.f32 %v549, %v692
    %v694 = vpop.f32.mrf.mxu0
    %695 = vmatprep.mubr.bf16.mxu0 %v509
    %696 = vmatmul.mubr.bf16.gmra.mxu0 %v508
    %v697 = vpop.f32.mrf.mxu0
    %v698 = vadd.f32 %v549, %v697
    %v699 = vpop.f32.mrf.mxu0
    %v700 = vpop.f32.mrf.mxu0
    %v701 = vadd.f32 %v549, %v700
    %v702 = vpop.f32.mrf.mxu0
    %703 = vmatprep.mubr.bf16.mxu0 %v511
    %704 = vmatmul.mubr.bf16.gmra.mxu0 %v510
    %v705 = vpop.f32.mrf.mxu0
    %v706 = vadd.f32 %v549, %v705
    %v707 = vpop.f32.mrf.mxu0
    %v708 = vpop.f32.mrf.mxu0
    %v709 = vadd.f32 %v549, %v708
    %v710 = vpop.f32.mrf.mxu0
    %711 = vdwg.mxu0
    %712 = vst [vmem:[#allocation10] sm:$0xff] %v682
    %713 = vst [vmem:[#allocation10 + $0x8] sm:$0xff] %v685
    %714 = vst [vmem:[#allocation10 + $0x10] sm:$0xff] %v690
    %715 = vst [vmem:[#allocation10 + $0x18] sm:$0xff] %v693
    %716 = vst [vmem:[#allocation10 + $0x20] sm:$0xff] %v698
    %717 = vst [vmem:[#allocation10 + $0x28] sm:$0xff] %v701
    %718 = vst [vmem:[#allocation10 + $0x30] sm:$0xff] %v706
    %719 = vst [vmem:[#allocation10 + $0x38] sm:$0xff] %v709
    // Predicated region
    $region38: #{tpu_custom_call.1} parent=1 // pred_check
      _
    $region39: #{tpu_custom_call.1} parent=1 // pred_check_branch
      %721 = sbr.rel (0) target = $region41
    $region40: #{tpu_custom_call.1} parent=1 // pred_region
      %s723 = ssub.s32 1024, 1024
      %724 = vsyncadd [#allocation4], %s723
      %s725 = sshll.u32 [#allocation10], 4
      %s726 = int_to_ptr.vmem [resolvable:$true] %s725
      %731 = dma.vmem_to_hbm [thread:$0]  %s726, 1024, %s5, [#allocation4], 128, 128, 8
    $region41: #{tpu_custom_call.1} parent=1 // pred_fallthru
      _
    // Predicated region
    $region42: #{tpu_custom_call.1} parent=1 // pred_check
      _
    $region43: #{tpu_custom_call.1} parent=1 // pred_check_branch
      %733 = sbr.rel (0) target = $region45
    $region44: #{tpu_custom_call.1} parent=1 // pred_region
      %734 = dma.done [#allocation4], 1024
    $region45: #{tpu_custom_call.1} parent=1 // pred_fallthru
      _
    %735 = vsyncpa [#allocation3], 1
    %736 = vsyncpa [#allocation6], 1
    %737 = vsyncpa [#allocation9], 1
    %738 = vsyncpa [#allocation4], 1

// kernel: tpu_custom_call.1
$region0: #{tpu_custom_call.1}
  #allocation0 [shape = 'u32[]', space=smem, size = 0x4, offset = 0x4, fixed_abs, tag = 'smem constant byte address 0x4 - core index']
  #allocation1 [shape = 'u32[144,128]{1,0:T(1,128)}', space=vmem, size = 0x12000, scoped, tag = 'internal scratch']
  %s0 = inlined_call_operand.hbm [shape: bf16[64,192], index: 0, kind: input, shape index: {}]
  %s1 = inlined_call_operand.hbm [shape: bf16[192,256], index: 1, kind: input, shape index: {}]
  %s2 = inlined_call_operand.hbm [shape: bf16[64,256], index: 2, kind: input, shape index: {}]
  %s3 = inlined_call_operand.hbm [shape: bf16[256,128], index: 3, kind: input, shape index: {}]
  %s4 = inlined_call_operand.vmem [shape: f32[1,128], index: 4, kind: input, shape index: {}]
  %s5 = inlined_call_operand.hbm [shape: f32[64,128], index: 5, kind: output, shape index: {}]
  %s6 = sld [smem:[#allocation0]]
  $region46: #{tpu_custom_call.1} parent=0
    _
  %s8 = ssub.s32 1, %s6
  %s9 = scalar_select 0, %s8, %s6
  $region1: #{tpu_custom_call.1} parent=0
    #allocation2 [shape = 'u8[32768]{0}', space=vmem, size = 0x8000, scoped, tag = 'input window, operand 0, single buffered']
    #allocation3 [shape = 's32[1]{0}', space=sflag, size = 0x4, scoped, tag = 'scoped memory for tpu_custom_call.1']
    #allocation4 [shape = 's32[1]{0}', space=sflag, size = 0x4, scoped, tag = 'scoped memory for tpu_custom_call.1']
    #allocation5 [shape = 'u8[98304]{0}', space=vmem, size = 0x18000, scoped, tag = 'input window, operand 1, single buffered']
    #allocation6 [shape = 's32[1]{0}', space=sflag, size = 0x4, scoped, tag = 'scoped memory for tpu_custom_call.1']
    #allocation7 [shape = 'u8[32768]{0}', space=vmem, size = 0x8000, scoped, tag = 'input window, operand 2, single buffered']
    #allocation8 [shape = 'u8[65536]{0}', space=vmem, size = 0x10000, scoped, tag = 'input window, operand 3, single buffered']
    #allocation9 [shape = 's32[1]{0}', space=sflag, size = 0x4, scoped, tag = 'scoped memory for tpu_custom_call.1']
    #allocation10 [shape = 'u8[32768]{0}', space=vmem, size = 0x8000, scoped, tag = 'output window, operand 0, single buffered']
    %10 = vsyncpa [#allocation3], 0
    %11 = vsyncpa [#allocation6], 0
    %12 = vsyncpa [#allocation9], 0
    %13 = vsyncpa [#allocation4], 0
    // Predicated region
    $region2: #{tpu_custom_call.1} parent=1 // pred_check
      _
    $region3: #{tpu_custom_call.1} parent=1 // pred_check_branch
      %15 = sbr.rel (0) target = $region5
    $region4: #{tpu_custom_call.1} parent=1 // pred_region
      %s17 = ssub.s32 1024, 1024
      %18 = vsyncadd [#allocation3], %s17
      %s19 = sshll.u32 [#allocation2], 4
      %s20 = int_to_ptr.vmem [resolvable:$true] %s19
      %25 = dma.hbm_to_vmem [thread:$0]  %s0, 1024, %s20, [#allocation3], 128, 128, 8
    $region5: #{tpu_custom_call.1} parent=1 // pred_fallthru
      _
    // Predicated region
    $region6: #{tpu_custom_call.1} parent=1 // pred_check
      _
    $region7: #{tpu_custom_call.1} parent=1 // pred_check_branch
      %27 = sbr.rel (0) target = $region9
    $region8: #{tpu_custom_call.1} parent=1 // pred_region
      %s29 = ssub.s32 3072, 3072
      %30 = vsyncadd [#allocation6], %s29
      %s31 = sshll.u32 [#allocation5], 4
      %s32 = int_to_ptr.vmem [resolvable:$true] %s31
      %37 = dma.hbm_to_vmem [thread:$0]  %s1, 3072, %s32, [#allocation6], 128, 128, 8
    $region9: #{tpu_custom_call.1} parent=1 // pred_fallthru
      _
    // Predicated region
    $region10: #{tpu_custom_call.1} parent=1 // pred_check
      _
    $region11: #{tpu_custom_call.1} parent=1 // pred_check_branch
      %39 = sbr.rel (0) target = $region13
    $region12: #{tpu_custom_call.1} parent=1 // pred_region
      %s41 = ssub.s32 1024, 1024
      %42 = vsyncadd [#allocation6], %s41
      %s43 = sshll.u32 [#allocation7], 4
      %s44 = int_to_ptr.vmem [resolvable:$true] %s43
      %49 = dma.hbm_to_vmem [thread:$0]  %s2, 1024, %s44, [#allocation6], 128, 128, 8
    $region13: #{tpu_custom_call.1} parent=1 // pred_fallthru
      _
    // Predicated region
    $region14: #{tpu_custom_call.1} parent=1 // pred_check
      _
    $region15: #{tpu_custom_call.1} parent=1 // pred_check_branch
      %51 = sbr.rel (0) target = $region17
    $region16: #{tpu_custom_call.1} parent=1 // pred_region
      %s53 = ssub.s32 2048, 2048
      %54 = vsyncadd [#allocation9], %s53
      %s55 = sshll.u32 [#allocation8], 4
      %s56 = int_to_ptr.vmem [resolvable:$true] %s55
      %61 = dma.hbm_to_vmem [thread:$0]  %s3, 2048, %s56, [#allocation9], 64, 64, 4
    $region17: #{tpu_custom_call.1} parent=1 // pred_fallthru
      _
    // Predicated region
    $region18: #{tpu_custom_call.1} parent=1 // pred_check
      _
    $region19: #{tpu_custom_call.1} parent=1 // pred_check_branch
      %63 = sbr.rel (0) target = $region21
    $region20: #{tpu_custom_call.1} parent=1 // pred_region
      _
    $region21: #{tpu_custom_call.1} parent=1 // pred_fallthru
      _
    // Predicated region
    $region22: #{tpu_custom_call.1} parent=1 // pred_check
      _
    $region23: #{tpu_custom_call.1} parent=1 // pred_check_branch
      %65 = sbr.rel (0) target = $region25
    $region24: #{tpu_custom_call.1} parent=1 // pred_region
      %66 = dma.done [#allocation3], 1024
    $region25: #{tpu_custom_call.1} parent=1 // pred_fallthru
      _
    // Predicated region
    $region26: #{tpu_custom_call.1} parent=1 // pred_check
      _
    $region27: #{tpu_custom_call.1} parent=1 // pred_check_branch
      %68 = sbr.rel (0) target = $region29
    $region28: #{tpu_custom_call.1} parent=1 // pred_region
      %69 = dma.done [#allocation6], 3072
    $region29: #{tpu_custom_call.1} parent=1 // pred_fallthru
      _
    // Predicated region
    $region30: #{tpu_custom_call.1} parent=1 // pred_check
      _
    $region31: #{tpu_custom_call.1} parent=1 // pred_check_branch
      %71 = sbr.rel (0) target = $region33
    $region32: #{tpu_custom_call.1} parent=1 // pred_region
      %72 = dma.done [#allocation6], 1024
    $region33: #{tpu_custom_call.1} parent=1 // pred_fallthru
      _
    // Predicated region
    $region34: #{tpu_custom_call.1} parent=1 // pred_check
      _
    $region35: #{tpu_custom_call.1} parent=1 // pred_check_branch
      %74 = sbr.rel (0) target = $region37
    $region36: #{tpu_custom_call.1} parent=1 // pred_region
      %75 = dma.done [#allocation9], 2048
    $region37: #{tpu_custom_call.1} parent=1 // pred_fallthru
      _
    %v77 = vld [vmem:[#allocation2] sm:$0xff]
    %v78 = vld [vmem:[#allocation2 + $0x8] sm:$0xff]
    %v79 = vld [vmem:[#allocation2 + $0x10] sm:$0xff]
    %v80 = vld [vmem:[#allocation2 + $0x18] sm:$0xff]
    %v81 = vld [vmem:[#allocation2 + $0x20] sm:$0xff]
    %v82 = vld [vmem:[#allocation2 + $0x28] sm:$0xff]
    %v83 = vld [vmem:[#allocation2 + $0x30] sm:$0xff]
    %v84 = vld [vmem:[#allocation2 + $0x38] sm:$0xff]
    %v85 = vld [vmem:[#allocation5] sm:$0xff]
    %v86 = vld [vmem:[#allocation5 + $0x8] sm:$0xff]
    %v87 = vld [vmem:[#allocation5 + $0x10] sm:$0xff]
    %v88 = vld [vmem:[#allocation5 + $0x18] sm:$0xff]
    %v89 = vld [vmem:[#allocation5 + $0x20] sm:$0xff]
    %v90 = vld [vmem:[#allocation5 + $0x28] sm:$0xff]
    %v91 = vld [vmem:[#allocation5 + $0x30] sm:$0xff]
    %v92 = vld [vmem:[#allocation5 + $0x38] sm:$0xff]
    %v93 = vld [vmem:[#allocation5 + $0x40] sm:$0xff]
    %v94 = vld [vmem:[#allocation5 + $0x48] sm:$0xff]
    %v95 = vld [vmem:[#allocation5 + $0x50] sm:$0xff]
    %v96 = vld [vmem:[#allocation5 + $0x58] sm:$0xff]
    %v97 = vld [vmem:[#allocation5 + $0x60] sm:$0xff]
    %v98 = vld [vmem:[#allocation5 + $0x68] sm:$0xff]
    %v99 = vld [vmem:[#allocation5 + $0x70] sm:$0xff]
    %v100 = vld [vmem:[#allocation5 + $0x78] sm:$0xff]
    %v101 = vld [vmem:[#allocation5 + $0x80] sm:$0xff]
    %v102 = vld [vmem:[#allocation5 + $0x88] sm:$0xff]
    %v103 = vld [vmem:[#allocation5 + $0x90] sm:$0xff]
    %v104 = vld [vmem:[#allocation5 + $0x98] sm:$0xff]
    %v105 = vld [vmem:[#allocation5 + $0xa0] sm:$0xff]
    %v106 = vld [vmem:[#allocation5 + $0xa8] sm:$0xff]
    %v107 = vld [vmem:[#allocation5 + $0xb0] sm:$0xff]
    %v108 = vld [vmem:[#allocation5 + $0xb8] sm:$0xff]
    %v109 = vld [vmem:[#allocation7] sm:$0xff]
    %v110 = vld [vmem:[#allocation7 + $0x8] sm:$0xff]
    %v111 = vld [vmem:[#allocation7 + $0x10] sm:$0xff]
    %v112 = vld [vmem:[#allocation7 + $0x18] sm:$0xff]
    %v113 = vld [vmem:[#allocation7 + $0x20] sm:$0xff]
    %v114 = vld [vmem:[#allocation7 + $0x28] sm:$0xff]
    %v115 = vld [vmem:[#allocation7 + $0x30] sm:$0xff]
    %v116 = vld [vmem:[#allocation7 + $0x38] sm:$0xff]
    %v117 = vunpack.c.l.bf16 %v109
    %v118 = vunpack.c.h.bf16 %v109
    %v119 = vunpack.c.l.bf16 %v110
    %v120 = vunpack.c.h.bf16 %v110
    %v121 = vunpack.c.l.bf16 %v111
    %v122 = vunpack.c.h.bf16 %v111
    %v123 = vunpack.c.l.bf16 %v112
    %v124 = vunpack.c.h.bf16 %v112
    %v125 = vunpack.c.l.bf16 %v113
    %v126 = vunpack.c.h.bf16 %v113
    %v127 = vunpack.c.l.bf16 %v114
    %v128 = vunpack.c.h.bf16 %v114
    %v129 = vunpack.c.l.bf16 %v115
    %v130 = vunpack.c.h.bf16 %v115
    %v131 = vunpack.c.l.bf16 %v116
    %v132 = vunpack.c.h.bf16 %v116
    %v141 = vunpack.c.l.b16 %v77
    %v142 = vunpack.c.h.b16 %v77
    %v143 = vunpack.c.l.b16 %v78
    %v144 = vunpack.c.h.b16 %v78
    %v145 = vunpack.c.l.b16 %v79
    %v146 = vunpack.c.h.b16 %v79
    %v147 = vunpack.c.l.b16 %v80
    %v148 = vunpack.c.h.b16 %v80
    %v149 = vunpack.c.l.b16 %v81
    %v150 = vunpack.c.h.b16 %v81
    %v151 = vunpack.c.l.b16 %v82
    %v152 = vunpack.c.h.b16 %v82
    %v153 = vunpack.c.l.b16 %v83
    %v154 = vunpack.c.h.b16 %v83
    %v155 = vunpack.c.l.b16 %v84
    %v156 = vunpack.c.h.b16 %v84
    %v157 = vpack.c.b16 %v143, %v141
    %v158 = vpack.c.b16 %v144, %v142
    %v159 = vpack.c.b16 %v147, %v145
    %v160 = vpack.c.b16 %v148, %v146
    %v161 = vpack.c.b16 %v151, %v149
    %v162 = vpack.c.b16 %v152, %v150
    %v163 = vpack.c.b16 %v155, %v153
    %v164 = vpack.c.b16 %v156, %v154
    %v193 = vunpack.c.l.b16 %v85
    %v194 = vunpack.c.h.b16 %v85
    %v195 = vunpack.c.l.b16 %v86
    %v196 = vunpack.c.h.b16 %v86
    %v197 = vunpack.c.l.b16 %v87
    %v198 = vunpack.c.h.b16 %v87
    %v199 = vunpack.c.l.b16 %v88
    %v200 = vunpack.c.h.b16 %v88
    %v201 = vunpack.c.l.b16 %v89
    %v202 = vunpack.c.h.b16 %v89
    %v203 = vunpack.c.l.b16 %v90
    %v204 = vunpack.c.h.b16 %v90
    %v205 = vunpack.c.l.b16 %v91
    %v206 = vunpack.c.h.b16 %v91
    %v207 = vunpack.c.l.b16 %v92
    %v208 = vunpack.c.h.b16 %v92
    %v209 = vunpack.c.l.b16 %v93
    %v210 = vunpack.c.h.b16 %v93
    %v211 = vunpack.c.l.b16 %v94
    %v212 = vunpack.c.h.b16 %v94
    %v213 = vunpack.c.l.b16 %v95
    %v214 = vunpack.c.h.b16 %v95
    %v215 = vunpack.c.l.b16 %v96
    %v216 = vunpack.c.h.b16 %v96
    %v217 = vunpack.c.l.b16 %v97
    %v218 = vunpack.c.h.b16 %v97
    %v219 = vunpack.c.l.b16 %v98
    %v220 = vunpack.c.h.b16 %v98
    %v221 = vunpack.c.l.b16 %v99
    %v222 = vunpack.c.h.b16 %v99
    %v223 = vunpack.c.l.b16 %v100
    %v224 = vunpack.c.h.b16 %v100
    %v225 = vunpack.c.l.b16 %v101
    %v226 = vunpack.c.h.b16 %v101
    %v227 = vunpack.c.l.b16 %v102
    %v228 = vunpack.c.h.b16 %v102
    %v229 = vunpack.c.l.b16 %v103
    %v230 = vunpack.c.h.b16 %v103
    %v231 = vunpack.c.l.b16 %v104
    %v232 = vunpack.c.h.b16 %v104
    %v233 = vunpack.c.l.b16 %v105
    %v234 = vunpack.c.h.b16 %v105
    %v235 = vunpack.c.l.b16 %v106
    %v236 = vunpack.c.h.b16 %v106
    %v237 = vunpack.c.l.b16 %v107
    %v238 = vunpack.c.h.b16 %v107
    %v239 = vunpack.c.l.b16 %v108
    %v240 = vunpack.c.h.b16 %v108
    %v241 = vpack.c.b16 %v195, %v193
    %v242 = vpack.c.b16 %v196, %v194
    %v243 = vpack.c.b16 %v199, %v197
    %v244 = vpack.c.b16 %v200, %v198
    %v245 = vpack.c.b16 %v203, %v201
    %v246 = vpack.c.b16 %v204, %v202
    %v247 = vpack.c.b16 %v207, %v205
    %v248 = vpack.c.b16 %v208, %v206
    %v249 = vpack.c.b16 %v211, %v209
    %v250 = vpack.c.b16 %v212, %v210
    %v251 = vpack.c.b16 %v215, %v213
    %v252 = vpack.c.b16 %v216, %v214
    %v253 = vpack.c.b16 %v219, %v217
    %v254 = vpack.c.b16 %v220, %v218
    %v255 = vpack.c.b16 %v223, %v221
    %v256 = vpack.c.b16 %v224, %v222
    %v257 = vpack.c.b16 %v227, %v225
    %v258 = vpack.c.b16 %v228, %v226
    %v259 = vpack.c.b16 %v231, %v229
    %v260 = vpack.c.b16 %v232, %v230
    %v261 = vpack.c.b16 %v235, %v233
    %v262 = vpack.c.b16 %v236, %v234
    %v263 = vpack.c.b16 %v239, %v237
    %v264 = vpack.c.b16 %v240, %v238
    %vm289 = vcmask 523264
    %v291 = vsel %vm289, %v158, 0
    %v294 = vsel %vm289, %v160, 0
    %v297 = vsel %vm289, %v162, 0
    %v300 = vsel %vm289, %v164, 0
    %302 = vmatprep.subr.bf16.mxu0 %v256
    %303 = vmatpush1.bf16.msra.mxu0 %v255
    %304 = vmatprep.subr.bf16.mxu0 %v254
    %305 = vmatpush1.bf16.msra.mxu0 %v253
    %306 = vmatprep.subr.bf16.mxu0 %v252
    %307 = vmatpush1.bf16.msra.mxu0 %v251
    %308 = vmatprep.subr.bf16.mxu0 %v250
    %309 = vmatpush1.bf16.msra.mxu0 %v249
    %310 = vmatprep.subr.bf16.mxu0 %v248
    %311 = vmatpush1.bf16.msra.mxu0 %v247
    %312 = vmatprep.subr.bf16.mxu0 %v246
    %313 = vmatpush1.bf16.msra.mxu0 %v245
    %314 = vmatprep.subr.bf16.mxu0 %v244
    %315 = vmatpush1.bf16.msra.mxu0 %v243
    %316 = vmatprep.subr.bf16.mxu0 %v242
    %317 = vmatpush1.bf16.msra.mxu0 %v241
    %318 = vmatprep.subr.bf16.mxu0 0
    %319 = vmatpush2.bf16.msra.mxu0 0
    %320 = vmatprep.subr.bf16.mxu0 0
    %321 = vmatpush2.bf16.msra.mxu0 0
    %322 = vmatprep.subr.bf16.mxu0 0
    %323 = vmatpush2.bf16.msra.mxu0 0
    %324 = vmatprep.subr.bf16.mxu0 0
    %325 = vmatpush2.bf16.msra.mxu0 0
    %326 = vmatprep.subr.bf16.mxu0 %v264
    %327 = vmatpush2.bf16.msra.mxu0 %v263
    %328 = vmatprep.subr.bf16.mxu0 %v262
    %329 = vmatpush2.bf16.msra.mxu0 %v261
    %330 = vmatprep.subr.bf16.mxu0 %v260
    %331 = vmatpush2.bf16.msra.mxu0 %v259
    %332 = vmatprep.subr.bf16.mxu0 %v258
    %333 = vmatpush2.bf16.msra.mxu0 %v257
    %334 = vmatprep.mubr.bf16.mxu0 %v291
    %335 = vmatmul.mubr.bf16.gmra.mxu0 %v157
    %v336 = vpop.f32.mrf.mxu0
    %v337 = vadd.f32 %v117, %v336
    %v338 = vpop.f32.mrf.mxu0
    %v339 = vadd.f32 %v118, %v338
    %v340 = vpop.f32.mrf.mxu0
    %v341 = vadd.f32 %v119, %v340
    %v342 = vpop.f32.mrf.mxu0
    %v343 = vadd.f32 %v120, %v342
    %344 = vmatprep.mubr.bf16.mxu0 %v294
    %345 = vmatmul.mubr.bf16.gmra.mxu0 %v159
    %v346 = vpop.f32.mrf.mxu0
    %v347 = vadd.f32 %v121, %v346
    %v348 = vpop.f32.mrf.mxu0
    %v349 = vadd.f32 %v122, %v348
    %v350 = vpop.f32.mrf.mxu0
    %v351 = vadd.f32 %v123, %v350
    %v352 = vpop.f32.mrf.mxu0
    %v353 = vadd.f32 %v124, %v352
    %354 = vmatprep.mubr.bf16.mxu0 %v297
    %355 = vmatmul.mubr.bf16.gmra.mxu0 %v161
    %v356 = vpop.f32.mrf.mxu0
    %v357 = vadd.f32 %v125, %v356
    %v358 = vpop.f32.mrf.mxu0
    %v359 = vadd.f32 %v126, %v358
    %v360 = vpop.f32.mrf.mxu0
    %v361 = vadd.f32 %v127, %v360
    %v362 = vpop.f32.mrf.mxu0
    %v363 = vadd.f32 %v128, %v362
    %364 = vmatprep.mubr.bf16.mxu0 %v300
    %365 = vmatmul.mubr.bf16.gmra.mxu0 %v163
    %v366 = vpop.f32.mrf.mxu0
    %v367 = vadd.f32 %v129, %v366
    %v368 = vpop.f32.mrf.mxu0
    %v369 = vadd.f32 %v130, %v368
    %v370 = vpop.f32.mrf.mxu0
    %v371 = vadd.f32 %v131, %v370
    %v372 = vpop.f32.mrf.mxu0
    %v373 = vadd.f32 %v132, %v372
    %374 = vdwg.mxu0
    %v375 = vadd.f32 %v337, %v339
    %376 = vadd.xlane.f32.xlu0 %v375
    %v377 = vpop.xlane.xlu0 %376
    %v378 = vadd.f32 %v341, %v343
    %379 = vadd.xlane.f32.xlu0 %v378
    %v380 = vpop.xlane.xlu0 %379
    %v381 = vadd.f32 %v347, %v349
    %382 = vadd.xlane.f32.xlu0 %v381
    %v383 = vpop.xlane.xlu0 %382
    %v384 = vadd.f32 %v351, %v353
    %385 = vadd.xlane.f32.xlu0 %v384
    %v386 = vpop.xlane.xlu0 %385
    %v387 = vadd.f32 %v357, %v359
    %388 = vadd.xlane.f32.xlu0 %v387
    %v389 = vpop.xlane.xlu0 %388
    %v390 = vadd.f32 %v361, %v363
    %391 = vadd.xlane.f32.xlu0 %v390
    %v392 = vpop.xlane.xlu0 %391
    %v393 = vadd.f32 %v367, %v369
    %394 = vadd.xlane.f32.xlu0 %v393
    %v395 = vpop.xlane.xlu0 %394
    %v396 = vadd.f32 %v371, %v373
    %397 = vadd.xlane.f32.xlu0 %v396
    %v398 = vpop.xlane.xlu0 %397
    %v399 = vrcp.pop 256.0
    %v400 = vmul.f32 %v377, %v399
    %v401 = vmul.f32 %v380, %v399
    %v402 = vmul.f32 %v383, %v399
    %v403 = vmul.f32 %v386, %v399
    %v404 = vmul.f32 %v389, %v399
    %v405 = vmul.f32 %v392, %v399
    %v406 = vmul.f32 %v395, %v399
    %v407 = vmul.f32 %v398, %v399
    %v408 = vsub.f32 %v337, %v400
    %v409 = vsub.f32 %v339, %v400
    %v410 = vsub.f32 %v341, %v401
    %v411 = vsub.f32 %v343, %v401
    %v412 = vsub.f32 %v347, %v402
    %v413 = vsub.f32 %v349, %v402
    %v414 = vsub.f32 %v351, %v403
    %v415 = vsub.f32 %v353, %v403
    %v416 = vsub.f32 %v357, %v404
    %v417 = vsub.f32 %v359, %v404
    %v418 = vsub.f32 %v361, %v405
    %v419 = vsub.f32 %v363, %v405
    %v420 = vsub.f32 %v367, %v406
    %v421 = vsub.f32 %v369, %v406
    %v422 = vsub.f32 %v371, %v407
    %v423 = vsub.f32 %v373, %v407
    %v424 = vmul.f32 %v408, %v408
    %v425 = vmul.f32 %v409, %v409
    %v426 = vmul.f32 %v410, %v410
    %v427 = vmul.f32 %v411, %v411
    %v428 = vmul.f32 %v412, %v412
    %v429 = vmul.f32 %v413, %v413
    %v430 = vmul.f32 %v414, %v414
    %v431 = vmul.f32 %v415, %v415
    %v432 = vmul.f32 %v416, %v416
    %v433 = vmul.f32 %v417, %v417
    %v434 = vmul.f32 %v418, %v418
    %v435 = vmul.f32 %v419, %v419
    %v436 = vmul.f32 %v420, %v420
    %v437 = vmul.f32 %v421, %v421
    %v438 = vmul.f32 %v422, %v422
    %v439 = vmul.f32 %v423, %v423
    %v440 = vadd.f32 %v424, %v425
    %441 = vadd.xlane.f32.xlu0 %v440
    %v442 = vpop.xlane.xlu0 %441
    %v443 = vadd.f32 %v426, %v427
    %444 = vadd.xlane.f32.xlu0 %v443
    %v445 = vpop.xlane.xlu0 %444
    %v446 = vadd.f32 %v428, %v429
    %447 = vadd.xlane.f32.xlu0 %v446
    %v448 = vpop.xlane.xlu0 %447
    %v449 = vadd.f32 %v430, %v431
    %450 = vadd.xlane.f32.xlu0 %v449
    %v451 = vpop.xlane.xlu0 %450
    %v452 = vadd.f32 %v432, %v433
    %453 = vadd.xlane.f32.xlu0 %v452
    %v454 = vpop.xlane.xlu0 %453
    %v455 = vadd.f32 %v434, %v435
    %456 = vadd.xlane.f32.xlu0 %v455
    %v457 = vpop.xlane.xlu0 %456
    %v458 = vadd.f32 %v436, %v437
    %459 = vadd.xlane.f32.xlu0 %v458
    %v460 = vpop.xlane.xlu0 %459
    %v461 = vadd.f32 %v438, %v439
    %462 = vadd.xlane.f32.xlu0 %v461
    %v463 = vpop.xlane.xlu0 %462
    %v464 = vmul.f32 %v442, %v399
    %v465 = vmul.f32 %v445, %v399
    %v466 = vmul.f32 %v448, %v399
    %v467 = vmul.f32 %v451, %v399
    %v468 = vmul.f32 %v454, %v399
    %v469 = vmul.f32 %v457, %v399
    %v470 = vmul.f32 %v460, %v399
    %v471 = vmul.f32 %v463, %v399
    %v472 = vadd.f32 %v464, 1e-06
    %v473 = vadd.f32 %v465, 1e-06
    %v474 = vadd.f32 %v466, 1e-06
    %v475 = vadd.f32 %v467, 1e-06
    %v476 = vadd.f32 %v468, 1e-06
    %v477 = vadd.f32 %v469, 1e-06
    %v478 = vadd.f32 %v470, 1e-06
    %v479 = vadd.f32 %v471, 1e-06
    %v480 = vrsqrt.pop %v472
    %v481 = vrsqrt.pop %v473
    %v482 = vrsqrt.pop %v474
    %v483 = vrsqrt.pop %v475
    %v484 = vrsqrt.pop %v476
    %v485 = vrsqrt.pop %v477
    %v486 = vrsqrt.pop %v478
    %v487 = vrsqrt.pop %v479
    %v488 = vmul.f32 %v408, %v480
    %v489 = vmul.f32 %v409, %v480
    %v490 = vmul.f32 %v410, %v481
    %v491 = vmul.f32 %v411, %v481
    %v492 = vmul.f32 %v412, %v482
    %v493 = vmul.f32 %v413, %v482
    %v494 = vmul.f32 %v414, %v483
    %v495 = vmul.f32 %v415, %v483
    %v496 = vmul.f32 %v416, %v484
    %v497 = vmul.f32 %v417, %v484
    %v498 = vmul.f32 %v418, %v485
    %v499 = vmul.f32 %v419, %v485
    %v500 = vmul.f32 %v420, %v486
    %v501 = vmul.f32 %v421, %v486
    %v502 = vmul.f32 %v422, %v487
    %v503 = vmul.f32 %v423, %v487
    %v504 = vpack.c.bf16 %v490, %v488
    %v505 = vpack.c.bf16 %v491, %v489
    %v506 = vpack.c.bf16 %v494, %v492
    %v507 = vpack.c.bf16 %v495, %v493
    %v508 = vpack.c.bf16 %v498, %v496
    %v509 = vpack.c.bf16 %v499, %v497
    %v510 = vpack.c.bf16 %v502, %v500
    %v511 = vpack.c.bf16 %v503, %v501
    %v512 = vld [vmem:[#allocation8] sm:$0xf]
    %v513 = vld [vmem:[#allocation8 + $0x4] sm:$0xf]
    %v514 = vld [vmem:[#allocation8 + $0x8] sm:$0xf]
    %v515 = vld [vmem:[#allocation8 + $0xc] sm:$0xf]
    %v516 = vld [vmem:[#allocation8 + $0x10] sm:$0xf]
    %v517 = vld [vmem:[#allocation8 + $0x14] sm:$0xf]
    %v518 = vld [vmem:[#allocation8 + $0x18] sm:$0xf]
    %v519 = vld [vmem:[#allocation8 + $0x1c] sm:$0xf]
    %v520 = vld [vmem:[#allocation8 + $0x20] sm:$0xf]
    %v521 = vld [vmem:[#allocation8 + $0x24] sm:$0xf]
    %v522 = vld [vmem:[#allocation8 + $0x28] sm:$0xf]
    %v523 = vld [vmem:[#allocation8 + $0x2c] sm:$0xf]
    %v524 = vld [vmem:[#allocation8 + $0x30] sm:$0xf]
    %v525 = vld [vmem:[#allocation8 + $0x34] sm:$0xf]
    %v526 = vld [vmem:[#allocation8 + $0x38] sm:$0xf]
    %v527 = vld [vmem:[#allocation8 + $0x3c] sm:$0xf]
    %v528 = vld [vmem:[#allocation8 + $0x40] sm:$0xf]
    %v529 = vld [vmem:[#allocation8 + $0x44] sm:$0xf]
    %v530 = vld [vmem:[#allocation8 + $0x48] sm:$0xf]
    %v531 = vld [vmem:[#allocation8 + $0x4c] sm:$0xf]
    %v532 = vld [vmem:[#allocation8 + $0x50] sm:$0xf]
    %v533 = vld [vmem:[#allocation8 + $0x54] sm:$0xf]
    %v534 = vld [vmem:[#allocation8 + $0x58] sm:$0xf]
    %v535 = vld [vmem:[#allocation8 + $0x5c] sm:$0xf]
    %v536 = vld [vmem:[#allocation8 + $0x60] sm:$0xf]
    %v537 = vld [vmem:[#allocation8 + $0x64] sm:$0xf]
    %v538 = vld [vmem:[#allocation8 + $0x68] sm:$0xf]
    %v539 = vld [vmem:[#allocation8 + $0x6c] sm:$0xf]
    %v540 = vld [vmem:[#allocation8 + $0x70] sm:$0xf]
    %v541 = vld [vmem:[#allocation8 + $0x74] sm:$0xf]
    %v542 = vld [vmem:[#allocation8 + $0x78] sm:$0xf]
    %v543 = vld [vmem:[#allocation8 + $0x7c] sm:$0xf]
    %v544 = vld [vmem:[%s4] sm:$0x1]
    %v546 = vlaneseq
    %v547 = vshrl.u32 %v546, 7
    %v548 = vsub.s32 0, %v547
    %v549 = vrot.slane %v544, %v548
    %v583 = vunpack.c.l.b16 %v512
    %v584 = vunpack.c.l.b16 %v513
    %v585 = vunpack.c.l.b16 %v514
    %v586 = vunpack.c.l.b16 %v515
    %v587 = vunpack.c.l.b16 %v516
    %v588 = vunpack.c.l.b16 %v517
    %v589 = vunpack.c.l.b16 %v518
    %v590 = vunpack.c.l.b16 %v519
    %v591 = vunpack.c.l.b16 %v520
    %v592 = vunpack.c.l.b16 %v521
    %v593 = vunpack.c.l.b16 %v522
    %v594 = vunpack.c.l.b16 %v523
    %v595 = vunpack.c.l.b16 %v524
    %v596 = vunpack.c.l.b16 %v525
    %v597 = vunpack.c.l.b16 %v526
    %v598 = vunpack.c.l.b16 %v527
    %v599 = vunpack.c.l.b16 %v528
    %v600 = vunpack.c.l.b16 %v529
    %v601 = vunpack.c.l.b16 %v530
    %v602 = vunpack.c.l.b16 %v531
    %v603 = vunpack.c.l.b16 %v532
    %v604 = vunpack.c.l.b16 %v533
    %v605 = vunpack.c.l.b16 %v534
    %v606 = vunpack.c.l.b16 %v535
    %v607 = vunpack.c.l.b16 %v536
    %v608 = vunpack.c.l.b16 %v537
    %v609 = vunpack.c.l.b16 %v538
    %v610 = vunpack.c.l.b16 %v539
    %v611 = vunpack.c.l.b16 %v540
    %v612 = vunpack.c.l.b16 %v541
    %v613 = vunpack.c.l.b16 %v542
    %v614 = vunpack.c.l.b16 %v543
    %v615 = vpack.c.b16 %v584, %v583
    %v616 = vpack.c.b16 %v586, %v585
    %v617 = vpack.c.b16 %v588, %v587
    %v618 = vpack.c.b16 %v590, %v589
    %v619 = vpack.c.b16 %v592, %v591
    %v620 = vpack.c.b16 %v594, %v593
    %v621 = vpack.c.b16 %v596, %v595
    %v622 = vpack.c.b16 %v598, %v597
    %v623 = vpack.c.b16 %v600, %v599
    %v624 = vpack.c.b16 %v602, %v601
    %v625 = vpack.c.b16 %v604, %v603
    %v626 = vpack.c.b16 %v606, %v605
    %v627 = vpack.c.b16 %v608, %v607
    %v628 = vpack.c.b16 %v610, %v609
    %v629 = vpack.c.b16 %v612, %v611
    %v630 = vpack.c.b16 %v614, %v613
    %647 = vmatprep.subr.bf16.mxu0 0
    %648 = vmatpush1.bf16.msra.mxu0 %v622
    %649 = vmatprep.subr.bf16.mxu0 0
    %650 = vmatpush1.bf16.msra.mxu0 %v621
    %651 = vmatprep.subr.bf16.mxu0 0
    %652 = vmatpush1.bf16.msra.mxu0 %v620
    %653 = vmatprep.subr.bf16.mxu0 0
    %654 = vmatpush1.bf16.msra.mxu0 %v619
    %655 = vmatprep.subr.bf16.mxu0 0
    %656 = vmatpush1.bf16.msra.mxu0 %v618
    %657 = vmatprep.subr.bf16.mxu0 0
    %658 = vmatpush1.bf16.msra.mxu0 %v617
    %659 = vmatprep.subr.bf16.mxu0 0
    %660 = vmatpush1.bf16.msra.mxu0 %v616
    %661 = vmatprep.subr.bf16.mxu0 0
    %662 = vmatpush1.bf16.msra.mxu0 %v615
    %663 = vmatprep.subr.bf16.mxu0 0
    %664 = vmatpush2.bf16.msra.mxu0 %v630
    %665 = vmatprep.subr.bf16.mxu0 0
    %666 = vmatpush2.bf16.msra.mxu0 %v629
    %667 = vmatprep.subr.bf16.mxu0 0
    %668 = vmatpush2.bf16.msra.mxu0 %v628
    %669 = vmatprep.subr.bf16.mxu0 0
    %670 = vmatpush2.bf16.msra.mxu0 %v627
    %671 = vmatprep.subr.bf16.mxu0 0
    %672 = vmatpush2.bf16.msra.mxu0 %v626
    %673 = vmatprep.subr.bf16.mxu0 0
    %674 = vmatpush2.bf16.msra.mxu0 %v625
    %675 = vmatprep.subr.bf16.mxu0 0
    %676 = vmatpush2.bf16.msra.mxu0 %v624
    %677 = vmatprep.subr.bf16.mxu0 0
    %678 = vmatpush2.bf16.msra.mxu0 %v623
    %679 = vmatprep.mubr.bf16.mxu0 %v505
    %680 = vmatmul.mubr.bf16.gmra.mxu0 %v504
    %v681 = vpop.f32.mrf.mxu0
    %v682 = vadd.f32 %v549, %v681
    %v683 = vpop.f32.mrf.mxu0
    %v684 = vpop.f32.mrf.mxu0
    %v685 = vadd.f32 %v549, %v684
    %v686 = vpop.f32.mrf.mxu0
    %687 = vmatprep.mubr.bf16.mxu0 %v507
    %688 = vmatmul.mubr.bf16.gmra.mxu0 %v506
    %v689 = vpop.f32.mrf.mxu0
    %v690 = vadd.f32 %v549, %v689
    %v691 = vpop.f32.mrf.mxu0
    %v692 = vpop.f32.mrf.mxu0
    %v693 = vadd.f32 %v549, %v692
    %v694 = vpop.f32.mrf.mxu0
    %695 = vmatprep.mubr.bf16.mxu0 %v509
    %696 = vmatmul.mubr.bf16.gmra.mxu0 %v508
    %v697 = vpop.f32.mrf.mxu0
    %v698 = vadd.f32 %v549, %v697
    %v699 = vpop.f32.mrf.mxu0
    %v700 = vpop.f32.mrf.mxu0
    %v701 = vadd.f32 %v549, %v700
    %v702 = vpop.f32.mrf.mxu0
    %703 = vmatprep.mubr.bf16.mxu0 %v511
    %704 = vmatmul.mubr.bf16.gmra.mxu0 %v510
    %v705 = vpop.f32.mrf.mxu0
    %v706 = vadd.f32 %v549, %v705
    %v707 = vpop.f32.mrf.mxu0
    %v708 = vpop.f32.mrf.mxu0
    %v709 = vadd.f32 %v549, %v708
    %v710 = vpop.f32.mrf.mxu0
    %711 = vdwg.mxu0
    %712 = vst [vmem:[#allocation10] sm:$0xff] %v682
    %713 = vst [vmem:[#allocation10 + $0x8] sm:$0xff] %v685
    %714 = vst [vmem:[#allocation10 + $0x10] sm:$0xff] %v690
    %715 = vst [vmem:[#allocation10 + $0x18] sm:$0xff] %v693
    %716 = vst [vmem:[#allocation10 + $0x20] sm:$0xff] %v698
    %717 = vst [vmem:[#allocation10 + $0x28] sm:$0xff] %v701
    %718 = vst [vmem:[#allocation10 + $0x30] sm:$0xff] %v706
    %719 = vst [vmem:[#allocation10 + $0x38] sm:$0xff] %v709
    // Predicated region
    $region38: #{tpu_custom_call.1} parent=1 // pred_check
      _
    $region39: #{tpu_custom_call.1} parent=1 // pred_check_branch
      %721 = sbr.rel (0) target = $region41
    $region40: #{tpu_custom_call.1} parent=1 // pred_region
      %s723 = ssub.s32 1024, 1024
      %724 = vsyncadd [#allocation4], %s723
      %s725 = sshll.u32 [#allocation10], 4
      %s726 = int_to_ptr.vmem [resolvable:$true] %s725
      %731 = dma.vmem_to_hbm [thread:$0]  %s726, 1024, %s5, [#allocation4], 128, 128, 8
    $region41: #{tpu_custom_call.1} parent=1 // pred_fallthru
      _
    // Predicated region
    $region42: #{tpu_custom_call.1} parent=1 // pred_check
      _
    $region43: #{tpu_custom_call.1} parent=1 // pred_check_branch
      %733 = sbr.rel (0) target = $region45
    $region44: #{tpu_custom_call.1} parent=1 // pred_region
      %734 = dma.done [#allocation4], 1024
    $region45: #{tpu_custom_call.1} parent=1 // pred_fallthru
      _
    %735 = vsyncpa [#allocation3], 1
    %736 = vsyncpa [#allocation6], 1
    %737 = vsyncpa [#allocation9], 1
    %738 = vsyncpa [#allocation4], 1

</llo_original>
